<compile_context>
chip_gen: v6e
topology: v6e:2x2x1
jax: 0.10.0
libtpu: 0.0.40
codegen_flags: <defaults>
</compile_context>

<pallas_src>
import jax
import jax.numpy as jnp
from jax.experimental import pallas as pl
from jax.experimental.pallas import tpu as pltpu


# ----------------------------------------------------------------------------
# Kernel: fused 1x1 conv (channel matmul) + bias + LeakyReLU(0.1) on a row tile
# ----------------------------------------------------------------------------
def _hint_kernel(x_ref, w_ref, b_ref, o_ref):
    """x_ref: (tm, C_in), w_ref: (C_in, C_out) bf16, b_ref: (1, C_out) f32,
    o_ref: (tm, C_out) f32."""
    c_in = x_ref.shape[1]
    bias = b_ref[...].astype(jnp.float32)                      # (1, C_out)
    if c_in <= 8:
        # Lane-sparse K: do rank-1 updates on the VPU instead of an MXU matmul
        # that would be >96% K-padding.
        x = x_ref[...].astype(jnp.float32)
        w = w_ref[...].astype(jnp.float32)
        h = jnp.zeros((x_ref.shape[0], w_ref.shape[1]), jnp.float32) + bias
        for k in range(c_in):                                  # static unroll
            h = h + x[:, k:k + 1] * w[k:k + 1, :]
    else:
        # bf16 operands, f32 accumulation -> MXU fast path on all generations.
        h = jnp.dot(x_ref[...].astype(jnp.bfloat16), w_ref[...],
                    preferred_element_type=jnp.float32) + bias
    o_ref[...] = jnp.where(h >= 0.0, h, 0.1 * h).astype(o_ref.dtype)


# ----------------------------------------------------------------------------
# Wrapper
# ----------------------------------------------------------------------------
def _pick_row_tile(m):
    """Largest row tile (sublane-aligned) dividing m, capped for VMEM headroom."""
    for t in (1024, 512, 256, 128, 64, 32, 16, 8):
        if m % t == 0:
            return t
    return m                      # fall back to full extent (always legal)


@jax.jit
def _hint_layer_apply(x_nchw, w, b):
    """One hint layer: LeakyReLU(Conv1x1(x)), NCHW in / NCHW out."""
    n, c_in, hh, ww = x_nchw.shape
    c_out = w.shape[1]
    m = n * hh * ww
    # NCHW -> (N, H, W, C) -> (M, C): channels on the lane dim.
    xp = jnp.transpose(x_nchw, (0, 2, 3, 1)).reshape(m, c_in)
    tm = _pick_row_tile(m)
    out = pl.pallas_call(
        _hint_kernel,
        out_shape=jax.ShapeDtypeStruct((m, c_out), jnp.float32),
        grid=(m // tm,),
        in_specs=[pl.BlockSpec((tm, c_in), lambda i: (i, 0)),
                  pl.BlockSpec((c_in, c_out), lambda i: (0, 0)),
                  pl.BlockSpec((1, c_out), lambda i: (0, 0))],
        out_specs=pl.BlockSpec((tm, c_out), lambda i: (i, 0)),
        compiler_params=pltpu.CompilerParams(
            dimension_semantics=("parallel",),
            vmem_limit_bytes=32 << 20),
    )(xp, w, b)
    # Back to PyTorch NCHW layout.
    return jnp.transpose(out.reshape(n, hh, ww, c_out), (0, 3, 1, 2))


def hint_model_forward(fts, params):
    """Mirrors HintModel.forward: list of LeakyReLU(Conv1x1(x)) per feature map."""
    return [_hint_layer_apply(x, w, b) for x, (w, b) in zip(fts, params)]


def init_hint_params(key, c_in, c_out):
    """Conv2d(c_in, c_out, 1x1) params: W (C_in, C_out) bf16, bias (1, C_out) f32."""
    k1, k2 = jax.random.split(key)
    bound = 1.0 / (c_in ** 0.5)
    w = jax.random.uniform(k1, (c_in, c_out), jnp.float32, -bound, bound)
    b = jax.random.uniform(k2, (1, c_out), jnp.float32, -bound, bound)
    return w.astype(jnp.bfloat16), b


# ----------------------------------------------------------------------------
if __name__ == "__main__":
    key = jax.random.PRNGKey(0)
    k1, k2, k3, k4, k5, k6 = jax.random.split(key, 6)

    # Synthetic student feature maps (NCHW) and teacher channel counts
    # (spatial sizes match, so every pair gets a hint layer).
    fts = [
        jax.random.normal(k1, (2, 4, 16, 16), jnp.float32),    # hint 0:  4 -> 16 ch
        jax.random.normal(k2, (2, 8, 8, 8), jnp.float32),      # hint 1:  8 -> 32 ch
        jax.random.normal(k3, (2, 32, 8, 8), jnp.float32),     # hint 2: 32 -> 64 ch
    ]
    teacher_channels = [16, 32, 64]
    params = [
        init_hint_params(k4, fts[0].shape[1], teacher_channels[0]),
        init_hint_params(k5, fts[1].shape[1], teacher_channels[1]),
        init_hint_params(k6, fts[2].shape[1], teacher_channels[2]),
    ]

    ys = hint_model_forward(fts, params)
    ys = jax.block_until_ready(ys)

    for x, (w, b), y, c_t in zip(fts, params, ys, teacher_channels):
        n, _, hh, ww = x.shape
        assert y.shape == (n, c_t, hh, ww), y.shape
        # Pure-JAX reference (same bf16 weights, f32 math).
        ref = jnp.einsum("nchw,co->nohw", x, w.astype(jnp.float32))
        ref = ref + b[0].reshape(1, -1, 1, 1)
        ref = jnp.where(ref >= 0.0, ref, 0.1 * ref)
        assert bool(jnp.all(jnp.isfinite(y)))
        assert bool(jnp.allclose(y, ref, rtol=2e-2, atol=2e-2))

    print("KERNEL_OK")
</pallas_src>

<mosaic_0001>
module attributes {stable_mosaic.version = 11 : i64} {
  func.func @_hint_kernel(%arg0: i32, %arg1: memref<512x4xf32, #tpu.memory_space<vmem>>, %arg2: memref<4x16xbf16, #tpu.memory_space<vmem>>, %arg3: memref<1x16xf32, #tpu.memory_space<vmem>>, %arg4: memref<512x16xf32, #tpu.memory_space<vmem>>) attributes {dimension_semantics = [#tpu.dimension_semantics<parallel>], iteration_bounds = array<i64: 1>, scalar_prefetch = 0 : i64, scratch_operands = 0 : i64, tpu.core_type = #tpu.core_type<tc>, window_params = [{transform_indices = @transform_0, window_bounds = array<i64: 512, 4>}, {pipeline_mode = #tpu.pipeline_mode<synchronous>, transform_indices = @transform_1, window_bounds = array<i64: 4, 16>}, {pipeline_mode = #tpu.pipeline_mode<synchronous>, transform_indices = @transform_2, window_bounds = array<i64: 1, 16>}, {transform_indices = @transform_3, window_bounds = array<i64: 512, 16>}]} {
    %c0 = arith.constant 0 : index
    %c0_0 = arith.constant 0 : index
    %0 = vector.load %arg3[%c0, %c0_0] : memref<1x16xf32, #tpu.memory_space<vmem>>, vector<1x16xf32>
    %c0_1 = arith.constant 0 : index
    %c0_2 = arith.constant 0 : index
    %1 = vector.load %arg1[%c0_1, %c0_2] : memref<512x4xf32, #tpu.memory_space<vmem>>, vector<512x4xf32>
    %c0_3 = arith.constant 0 : index
    %c0_4 = arith.constant 0 : index
    %2 = vector.load %arg2[%c0_3, %c0_4] : memref<4x16xbf16, #tpu.memory_space<vmem>>, vector<4x16xbf16>
    %3 = arith.extf %2 : vector<4x16xbf16> to vector<4x16xf32>
    %cst = arith.constant 0.000000e+00 : f32
    %4 = vector.broadcast %cst : f32 to vector<512x16xf32>
    %5 = vector.broadcast %0 : vector<1x16xf32> to vector<512x16xf32>
    %6 = arith.addf %4, %5 : vector<512x16xf32>
    %7 = vector.extract_strided_slice %1 {offsets = [0, 0], sizes = [512, 1], strides = [1, 1]} : vector<512x4xf32> to vector<512x1xf32>
    %8 = vector.extract_strided_slice %3 {offsets = [0, 0], sizes = [1, 16], strides = [1, 1]} : vector<4x16xf32> to vector<1x16xf32>
    %9 = vector.broadcast %7 : vector<512x1xf32> to vector<512x16xf32>
    %10 = vector.broadcast %8 : vector<1x16xf32> to vector<512x16xf32>
    %11 = arith.mulf %9, %10 : vector<512x16xf32>
    %12 = arith.addf %6, %11 : vector<512x16xf32>
    %13 = vector.extract_strided_slice %1 {offsets = [0, 1], sizes = [512, 1], strides = [1, 1]} : vector<512x4xf32> to vector<512x1xf32>
    %14 = vector.extract_strided_slice %3 {offsets = [1, 0], sizes = [1, 16], strides = [1, 1]} : vector<4x16xf32> to vector<1x16xf32>
    %15 = vector.broadcast %13 : vector<512x1xf32> to vector<512x16xf32>
    %16 = vector.broadcast %14 : vector<1x16xf32> to vector<512x16xf32>
    %17 = arith.mulf %15, %16 : vector<512x16xf32>
    %18 = arith.addf %12, %17 : vector<512x16xf32>
    %19 = vector.extract_strided_slice %1 {offsets = [0, 2], sizes = [512, 1], strides = [1, 1]} : vector<512x4xf32> to vector<512x1xf32>
    %20 = vector.extract_strided_slice %3 {offsets = [2, 0], sizes = [1, 16], strides = [1, 1]} : vector<4x16xf32> to vector<1x16xf32>
    %21 = vector.broadcast %19 : vector<512x1xf32> to vector<512x16xf32>
    %22 = vector.broadcast %20 : vector<1x16xf32> to vector<512x16xf32>
    %23 = arith.mulf %21, %22 : vector<512x16xf32>
    %24 = arith.addf %18, %23 : vector<512x16xf32>
    %25 = vector.extract_strided_slice %1 {offsets = [0, 3], sizes = [512, 1], strides = [1, 1]} : vector<512x4xf32> to vector<512x1xf32>
    %26 = vector.extract_strided_slice %3 {offsets = [3, 0], sizes = [1, 16], strides = [1, 1]} : vector<4x16xf32> to vector<1x16xf32>
    %27 = vector.broadcast %25 : vector<512x1xf32> to vector<512x16xf32>
    %28 = vector.broadcast %26 : vector<1x16xf32> to vector<512x16xf32>
    %29 = arith.mulf %27, %28 : vector<512x16xf32>
    %30 = arith.addf %24, %29 : vector<512x16xf32>
    %cst_5 = arith.constant 0.000000e+00 : f32
    %31 = vector.broadcast %cst_5 : f32 to vector<512x16xf32>
    %32 = arith.cmpf oge, %30, %31 : vector<512x16xf32>
    %cst_6 = arith.constant 1.000000e-01 : f32
    %33 = vector.broadcast %cst_6 : f32 to vector<512x16xf32>
    %34 = arith.mulf %33, %30 : vector<512x16xf32>
    %35 = arith.select %32, %30, %34 : vector<512x16xi1>, vector<512x16xf32>
    %c0_7 = arith.constant 0 : index
    %c0_8 = arith.constant 0 : index
    %36 = vector.load %arg4[%c0_7, %c0_8] : memref<512x16xf32, #tpu.memory_space<vmem>>, vector<512x16xf32>
    tpu.vector_store %arg4[%c0_7, %c0_8], %35 {strides = array<i32>} : memref<512x16xf32, #tpu.memory_space<vmem>>, vector<512x16xf32>,
    return
  }
  func.func @transform_0(%arg0: i32) -> (i32, i32) {
    %c0_i32 = arith.constant 0 : i32
    %c0_i32_0 = arith.constant 0 : i32
    return %arg0, %c0_i32 : i32, i32
  }
  func.func @transform_1(%arg0: i32) -> (i32, i32) {
    %c0_i32 = arith.constant 0 : i32
    %c0_i32_0 = arith.constant 0 : i32
    %c0_i32_1 = arith.constant 0 : i32
    return %c0_i32, %c0_i32_0 : i32, i32
  }
  func.func @transform_2(%arg0: i32) -> (i32, i32) {
    %c0_i32 = arith.constant 0 : i32
    %c0_i32_0 = arith.constant 0 : i32
    %c0_i32_1 = arith.constant 0 : i32
    return %c0_i32, %c0_i32_0 : i32, i32
  }
  func.func @transform_3(%arg0: i32) -> (i32, i32) {
    %c0_i32 = arith.constant 0 : i32
    %c0_i32_0 = arith.constant 0 : i32
    return %arg0, %c0_i32 : i32, i32
  }
}

</mosaic_0001>

<llo_original>
// kernel: _hint_layer_apply.1
$region0: #{_hint_layer_apply.1}
  #allocation0 [shape = 'u32[]', space=smem, size = 0x4, offset = 0x4, fixed_abs, tag = 'smem constant byte address 0x4 - core index']
  #allocation1 [shape = 'u32[144,128]{1,0:T(1,128)}', space=vmem, size = 0x12000, scoped, tag = 'internal scratch']
  %s0 = inlined_call_operand.vmem [shape: f32[512,4], index: 0, kind: input, shape index: {}]
  %s1 = inlined_call_operand.vmem [shape: bf16[4,16], index: 1, kind: input, shape index: {}]
  %s2 = inlined_call_operand.vmem [shape: f32[1,16], index: 2, kind: input, shape index: {}]
  %s3 = inlined_call_operand.vmem [shape: f32[512,16], index: 3, kind: output, shape index: {}]
  %s4 = sld [smem:[#allocation0]]
  $region22: #{_hint_layer_apply.1} parent=0
    _
  %s6 = ssub.s32 1, %s4
  %s7 = scalar_select 0, %s6, %s4
  // Predicated region
  $region2: #{_hint_layer_apply.1} parent=0 // pred_check
    _
  $region3: #{_hint_layer_apply.1} parent=0 // pred_check_branch
    %9 = sbr.rel (0) target = $region5
  $region4: #{_hint_layer_apply.1} parent=0 // pred_region
    _
  $region5: #{_hint_layer_apply.1} parent=0 // pred_fallthru
    _
  // Predicated region
  $region6: #{_hint_layer_apply.1} parent=0 // pred_check
    _
  $region7: #{_hint_layer_apply.1} parent=0 // pred_check_branch
    %11 = sbr.rel (0) target = $region9
  $region8: #{_hint_layer_apply.1} parent=0 // pred_region
    _
  $region9: #{_hint_layer_apply.1} parent=0 // pred_fallthru
    _
  // Predicated region
  $region10: #{_hint_layer_apply.1} parent=0 // pred_check
    _
  $region11: #{_hint_layer_apply.1} parent=0 // pred_check_branch
    %13 = sbr.rel (0) target = $region13
  $region12: #{_hint_layer_apply.1} parent=0 // pred_region
    _
  $region13: #{_hint_layer_apply.1} parent=0 // pred_fallthru
    _
  %v14 = vld [vmem:[%s2] sm:$0x1]
  %v15 = vld [vmem:[%s0] sm:$0xff]
  %v16 = vld [vmem:[%s0 + $0x8] sm:$0xff]
  %v17 = vld [vmem:[%s0 + $0x10] sm:$0xff]
  %v18 = vld [vmem:[%s0 + $0x18] sm:$0xff]
  %v19 = vld [vmem:[%s0 + $0x20] sm:$0xff]
  %v20 = vld [vmem:[%s0 + $0x28] sm:$0xff]
  %v21 = vld [vmem:[%s0 + $0x30] sm:$0xff]
  %v22 = vld [vmem:[%s0 + $0x38] sm:$0xff]
  %v23 = vld [vmem:[%s0 + $0x40] sm:$0xff]
  %v24 = vld [vmem:[%s0 + $0x48] sm:$0xff]
  %v25 = vld [vmem:[%s0 + $0x50] sm:$0xff]
  %v26 = vld [vmem:[%s0 + $0x58] sm:$0xff]
  %v27 = vld [vmem:[%s0 + $0x60] sm:$0xff]
  %v28 = vld [vmem:[%s0 + $0x68] sm:$0xff]
  %v29 = vld [vmem:[%s0 + $0x70] sm:$0xff]
  %v30 = vld [vmem:[%s0 + $0x78] sm:$0xff]
  %v31 = vld [vmem:[%s0 + $0x80] sm:$0xff]
  %v32 = vld [vmem:[%s0 + $0x88] sm:$0xff]
  %v33 = vld [vmem:[%s0 + $0x90] sm:$0xff]
  %v34 = vld [vmem:[%s0 + $0x98] sm:$0xff]
  %v35 = vld [vmem:[%s0 + $0xa0] sm:$0xff]
  %v36 = vld [vmem:[%s0 + $0xa8] sm:$0xff]
  %v37 = vld [vmem:[%s0 + $0xb0] sm:$0xff]
  %v38 = vld [vmem:[%s0 + $0xb8] sm:$0xff]
  %v39 = vld [vmem:[%s0 + $0xc0] sm:$0xff]
  %v40 = vld [vmem:[%s0 + $0xc8] sm:$0xff]
  %v41 = vld [vmem:[%s0 + $0xd0] sm:$0xff]
  %v42 = vld [vmem:[%s0 + $0xd8] sm:$0xff]
  %v43 = vld [vmem:[%s0 + $0xe0] sm:$0xff]
  %v44 = vld [vmem:[%s0 + $0xe8] sm:$0xff]
  %v45 = vld [vmem:[%s0 + $0xf0] sm:$0xff]
  %v46 = vld [vmem:[%s0 + $0xf8] sm:$0xff]
  %v47 = vld [vmem:[%s0 + $0x100] sm:$0xff]
  %v48 = vld [vmem:[%s0 + $0x108] sm:$0xff]
  %v49 = vld [vmem:[%s0 + $0x110] sm:$0xff]
  %v50 = vld [vmem:[%s0 + $0x118] sm:$0xff]
  %v51 = vld [vmem:[%s0 + $0x120] sm:$0xff]
  %v52 = vld [vmem:[%s0 + $0x128] sm:$0xff]
  %v53 = vld [vmem:[%s0 + $0x130] sm:$0xff]
  %v54 = vld [vmem:[%s0 + $0x138] sm:$0xff]
  %v55 = vld [vmem:[%s0 + $0x140] sm:$0xff]
  %v56 = vld [vmem:[%s0 + $0x148] sm:$0xff]
  %v57 = vld [vmem:[%s0 + $0x150] sm:$0xff]
  %v58 = vld [vmem:[%s0 + $0x158] sm:$0xff]
  %v59 = vld [vmem:[%s0 + $0x160] sm:$0xff]
  %v60 = vld [vmem:[%s0 + $0x168] sm:$0xff]
  %v61 = vld [vmem:[%s0 + $0x170] sm:$0xff]
  %v62 = vld [vmem:[%s0 + $0x178] sm:$0xff]
  %v63 = vld [vmem:[%s0 + $0x180] sm:$0xff]
  %v64 = vld [vmem:[%s0 + $0x188] sm:$0xff]
  %v65 = vld [vmem:[%s0 + $0x190] sm:$0xff]
  %v66 = vld [vmem:[%s0 + $0x198] sm:$0xff]
  %v67 = vld [vmem:[%s0 + $0x1a0] sm:$0xff]
  %v68 = vld [vmem:[%s0 + $0x1a8] sm:$0xff]
  %v69 = vld [vmem:[%s0 + $0x1b0] sm:$0xff]
  %v70 = vld [vmem:[%s0 + $0x1b8] sm:$0xff]
  %v71 = vld [vmem:[%s0 + $0x1c0] sm:$0xff]
  %v72 = vld [vmem:[%s0 + $0x1c8] sm:$0xff]
  %v73 = vld [vmem:[%s0 + $0x1d0] sm:$0xff]
  %v74 = vld [vmem:[%s0 + $0x1d8] sm:$0xff]
  %v75 = vld [vmem:[%s0 + $0x1e0] sm:$0xff]
  %v76 = vld [vmem:[%s0 + $0x1e8] sm:$0xff]
  %v77 = vld [vmem:[%s0 + $0x1f0] sm:$0xff]
  %v78 = vld [vmem:[%s0 + $0x1f8] sm:$0xff]
  %v79 = vld [vmem:[%s1] sm:$0x3]
  %v80 = vunpack.c.l.bf16 %v79
  %v82 = vlaneseq
  %v83 = vshrl.u32 %v82, 7
  %v84 = vsub.s32 0, %v83
  %v85 = vrot.slane %v14, %v84
  %v87 = vadd.f32 %v85, 0.0
  %89 = vset.pattern.permute.xlu0 0
  %90 = vperm.xlu0 %89, %v15
  %v91 = vpop.permute.xlu0 %90
  %94 = vset.pattern.permute.xlu0 0
  %95 = vperm.xlu0 %94, %v16
  %v96 = vpop.permute.xlu0 %95
  %99 = vset.pattern.permute.xlu0 0
  %100 = vperm.xlu0 %99, %v17
  %v101 = vpop.permute.xlu0 %100
  %104 = vset.pattern.permute.xlu0 0
  %105 = vperm.xlu0 %104, %v18
  %v106 = vpop.permute.xlu0 %105
  %109 = vset.pattern.permute.xlu0 0
  %110 = vperm.xlu0 %109, %v19
  %v111 = vpop.permute.xlu0 %110
  %114 = vset.pattern.permute.xlu0 0
  %115 = vperm.xlu0 %114, %v20
  %v116 = vpop.permute.xlu0 %115
  %119 = vset.pattern.permute.xlu0 0
  %120 = vperm.xlu0 %119, %v21
  %v121 = vpop.permute.xlu0 %120
  %124 = vset.pattern.permute.xlu0 0
  %125 = vperm.xlu0 %124, %v22
  %v126 = vpop.permute.xlu0 %125
  %129 = vset.pattern.permute.xlu0 0
  %130 = vperm.xlu0 %129, %v23
  %v131 = vpop.permute.xlu0 %130
  %134 = vset.pattern.permute.xlu0 0
  %135 = vperm.xlu0 %134, %v24
  %v136 = vpop.permute.xlu0 %135
  %139 = vset.pattern.permute.xlu0 0
  %140 = vperm.xlu0 %139, %v25
  %v141 = vpop.permute.xlu0 %140
  %144 = vset.pattern.permute.xlu0 0
  %145 = vperm.xlu0 %144, %v26
  %v146 = vpop.permute.xlu0 %145
  %149 = vset.pattern.permute.xlu0 0
  %150 = vperm.xlu0 %149, %v27
  %v151 = vpop.permute.xlu0 %150
  %154 = vset.pattern.permute.xlu0 0
  %155 = vperm.xlu0 %154, %v28
  %v156 = vpop.permute.xlu0 %155
  %159 = vset.pattern.permute.xlu0 0
  %160 = vperm.xlu0 %159, %v29
  %v161 = vpop.permute.xlu0 %160
  %164 = vset.pattern.permute.xlu0 0
  %165 = vperm.xlu0 %164, %v30
  %v166 = vpop.permute.xlu0 %165
  %169 = vset.pattern.permute.xlu0 0
  %170 = vperm.xlu0 %169, %v31
  %v171 = vpop.permute.xlu0 %170
  %174 = vset.pattern.permute.xlu0 0
  %175 = vperm.xlu0 %174, %v32
  %v176 = vpop.permute.xlu0 %175
  %179 = vset.pattern.permute.xlu0 0
  %180 = vperm.xlu0 %179, %v33
  %v181 = vpop.permute.xlu0 %180
  %184 = vset.pattern.permute.xlu0 0
  %185 = vperm.xlu0 %184, %v34
  %v186 = vpop.permute.xlu0 %185
  %189 = vset.pattern.permute.xlu0 0
  %190 = vperm.xlu0 %189, %v35
  %v191 = vpop.permute.xlu0 %190
  %194 = vset.pattern.permute.xlu0 0
  %195 = vperm.xlu0 %194, %v36
  %v196 = vpop.permute.xlu0 %195
  %199 = vset.pattern.permute.xlu0 0
  %200 = vperm.xlu0 %199, %v37
  %v201 = vpop.permute.xlu0 %200
  %204 = vset.pattern.permute.xlu0 0
  %205 = vperm.xlu0 %204, %v38
  %v206 = vpop.permute.xlu0 %205
  %209 = vset.pattern.permute.xlu0 0
  %210 = vperm.xlu0 %209, %v39
  %v211 = vpop.permute.xlu0 %210
  %214 = vset.pattern.permute.xlu0 0
  %215 = vperm.xlu0 %214, %v40
  %v216 = vpop.permute.xlu0 %215
  %219 = vset.pattern.permute.xlu0 0
  %220 = vperm.xlu0 %219, %v41
  %v221 = vpop.permute.xlu0 %220
  %224 = vset.pattern.permute.xlu0 0
  %225 = vperm.xlu0 %224, %v42
  %v226 = vpop.permute.xlu0 %225
  %229 = vset.pattern.permute.xlu0 0
  %230 = vperm.xlu0 %229, %v43
  %v231 = vpop.permute.xlu0 %230
  %234 = vset.pattern.permute.xlu0 0
  %235 = vperm.xlu0 %234, %v44
  %v236 = vpop.permute.xlu0 %235
  %239 = vset.pattern.permute.xlu0 0
  %240 = vperm.xlu0 %239, %v45
  %v241 = vpop.permute.xlu0 %240
  %244 = vset.pattern.permute.xlu0 0
  %245 = vperm.xlu0 %244, %v46
  %v246 = vpop.permute.xlu0 %245
  %249 = vset.pattern.permute.xlu0 0
  %250 = vperm.xlu0 %249, %v47
  %v251 = vpop.permute.xlu0 %250
  %254 = vset.pattern.permute.xlu0 0
  %255 = vperm.xlu0 %254, %v48
  %v256 = vpop.permute.xlu0 %255
  %259 = vset.pattern.permute.xlu0 0
  %260 = vperm.xlu0 %259, %v49
  %v261 = vpop.permute.xlu0 %260
  %264 = vset.pattern.permute.xlu0 0
  %265 = vperm.xlu0 %264, %v50
  %v266 = vpop.permute.xlu0 %265
  %269 = vset.pattern.permute.xlu0 0
  %270 = vperm.xlu0 %269, %v51
  %v271 = vpop.permute.xlu0 %270
  %274 = vset.pattern.permute.xlu0 0
  %275 = vperm.xlu0 %274, %v52
  %v276 = vpop.permute.xlu0 %275
  %279 = vset.pattern.permute.xlu0 0
  %280 = vperm.xlu0 %279, %v53
  %v281 = vpop.permute.xlu0 %280
  %284 = vset.pattern.permute.xlu0 0
  %285 = vperm.xlu0 %284, %v54
  %v286 = vpop.permute.xlu0 %285
  %289 = vset.pattern.permute.xlu0 0
  %290 = vperm.xlu0 %289, %v55
  %v291 = vpop.permute.xlu0 %290
  %294 = vset.pattern.permute.xlu0 0
  %295 = vperm.xlu0 %294, %v56
  %v296 = vpop.permute.xlu0 %295
  %299 = vset.pattern.permute.xlu0 0
  %300 = vperm.xlu0 %299, %v57
  %v301 = vpop.permute.xlu0 %300
  %304 = vset.pattern.permute.xlu0 0
  %305 = vperm.xlu0 %304, %v58
  %v306 = vpop.permute.xlu0 %305
  %309 = vset.pattern.permute.xlu0 0
  %310 = vperm.xlu0 %309, %v59
  %v311 = vpop.permute.xlu0 %310
  %314 = vset.pattern.permute.xlu0 0
  %315 = vperm.xlu0 %314, %v60
  %v316 = vpop.permute.xlu0 %315
  %319 = vset.pattern.permute.xlu0 0
  %320 = vperm.xlu0 %319, %v61
  %v321 = vpop.permute.xlu0 %320
  %324 = vset.pattern.permute.xlu0 0
  %325 = vperm.xlu0 %324, %v62
  %v326 = vpop.permute.xlu0 %325
  %329 = vset.pattern.permute.xlu0 0
  %330 = vperm.xlu0 %329, %v63
  %v331 = vpop.permute.xlu0 %330
  %334 = vset.pattern.permute.xlu0 0
  %335 = vperm.xlu0 %334, %v64
  %v336 = vpop.permute.xlu0 %335
  %339 = vset.pattern.permute.xlu0 0
  %340 = vperm.xlu0 %339, %v65
  %v341 = vpop.permute.xlu0 %340
  %344 = vset.pattern.permute.xlu0 0
  %345 = vperm.xlu0 %344, %v66
  %v346 = vpop.permute.xlu0 %345
  %349 = vset.pattern.permute.xlu0 0
  %350 = vperm.xlu0 %349, %v67
  %v351 = vpop.permute.xlu0 %350
  %354 = vset.pattern.permute.xlu0 0
  %355 = vperm.xlu0 %354, %v68
  %v356 = vpop.permute.xlu0 %355
  %359 = vset.pattern.permute.xlu0 0
  %360 = vperm.xlu0 %359, %v69
  %v361 = vpop.permute.xlu0 %360
  %364 = vset.pattern.permute.xlu0 0
  %365 = vperm.xlu0 %364, %v70
  %v366 = vpop.permute.xlu0 %365
  %369 = vset.pattern.permute.xlu0 0
  %370 = vperm.xlu0 %369, %v71
  %v371 = vpop.permute.xlu0 %370
  %374 = vset.pattern.permute.xlu0 0
  %375 = vperm.xlu0 %374, %v72
  %v376 = vpop.permute.xlu0 %375
  %379 = vset.pattern.permute.xlu0 0
  %380 = vperm.xlu0 %379, %v73
  %v381 = vpop.permute.xlu0 %380
  %384 = vset.pattern.permute.xlu0 0
  %385 = vperm.xlu0 %384, %v74
  %v386 = vpop.permute.xlu0 %385
  %389 = vset.pattern.permute.xlu0 0
  %390 = vperm.xlu0 %389, %v75
  %v391 = vpop.permute.xlu0 %390
  %394 = vset.pattern.permute.xlu0 0
  %395 = vperm.xlu0 %394, %v76
  %v396 = vpop.permute.xlu0 %395
  %399 = vset.pattern.permute.xlu0 0
  %400 = vperm.xlu0 %399, %v77
  %v401 = vpop.permute.xlu0 %400
  %404 = vset.pattern.permute.xlu0 0
  %405 = vperm.xlu0 %404, %v78
  %v406 = vpop.permute.xlu0 %405
  %v408 = vlaneseq
  %v409 = vshrl.u32 %v408, 7
  %v410 = vsub.s32 0, %v409
  %v411 = vrot.slane %v80, %v410
  %v412 = vmul.f32 %v91, %v411
  %v413 = vmul.f32 %v96, %v411
  %v414 = vmul.f32 %v101, %v411
  %v415 = vmul.f32 %v106, %v411
  %v416 = vmul.f32 %v111, %v411
  %v417 = vmul.f32 %v116, %v411
  %v418 = vmul.f32 %v121, %v411
  %v419 = vmul.f32 %v126, %v411
  %v420 = vmul.f32 %v131, %v411
  %v421 = vmul.f32 %v136, %v411
  %v422 = vmul.f32 %v141, %v411
  %v423 = vmul.f32 %v146, %v411
  %v424 = vmul.f32 %v151, %v411
  %v425 = vmul.f32 %v156, %v411
  %v426 = vmul.f32 %v161, %v411
  %v427 = vmul.f32 %v166, %v411
  %v428 = vmul.f32 %v171, %v411
  %v429 = vmul.f32 %v176, %v411
  %v430 = vmul.f32 %v181, %v411
  %v431 = vmul.f32 %v186, %v411
  %v432 = vmul.f32 %v191, %v411
  %v433 = vmul.f32 %v196, %v411
  %v434 = vmul.f32 %v201, %v411
  %v435 = vmul.f32 %v206, %v411
  %v436 = vmul.f32 %v211, %v411
  %v437 = vmul.f32 %v216, %v411
  %v438 = vmul.f32 %v221, %v411
  %v439 = vmul.f32 %v226, %v411
  %v440 = vmul.f32 %v231, %v411
  %v441 = vmul.f32 %v236, %v411
  %v442 = vmul.f32 %v241, %v411
  %v443 = vmul.f32 %v246, %v411
  %v444 = vmul.f32 %v251, %v411
  %v445 = vmul.f32 %v256, %v411
  %v446 = vmul.f32 %v261, %v411
  %v447 = vmul.f32 %v266, %v411
  %v448 = vmul.f32 %v271, %v411
  %v449 = vmul.f32 %v276, %v411
  %v450 = vmul.f32 %v281, %v411
  %v451 = vmul.f32 %v286, %v411
  %v452 = vmul.f32 %v291, %v411
  %v453 = vmul.f32 %v296, %v411
  %v454 = vmul.f32 %v301, %v411
  %v455 = vmul.f32 %v306, %v411
  %v456 = vmul.f32 %v311, %v411
  %v457 = vmul.f32 %v316, %v411
  %v458 = vmul.f32 %v321, %v411
  %v459 = vmul.f32 %v326, %v411
  %v460 = vmul.f32 %v331, %v411
  %v461 = vmul.f32 %v336, %v411
  %v462 = vmul.f32 %v341, %v411
  %v463 = vmul.f32 %v346, %v411
  %v464 = vmul.f32 %v351, %v411
  %v465 = vmul.f32 %v356, %v411
  %v466 = vmul.f32 %v361, %v411
  %v467 = vmul.f32 %v366, %v411
  %v468 = vmul.f32 %v371, %v411
  %v469 = vmul.f32 %v376, %v411
  %v470 = vmul.f32 %v381, %v411
  %v471 = vmul.f32 %v386, %v411
  %v472 = vmul.f32 %v391, %v411
  %v473 = vmul.f32 %v396, %v411
  %v474 = vmul.f32 %v401, %v411
  %v475 = vmul.f32 %v406, %v411
  %v476 = vadd.f32 %v87, %v412
  %v477 = vadd.f32 %v87, %v413
  %v478 = vadd.f32 %v87, %v414
  %v479 = vadd.f32 %v87, %v415
  %v480 = vadd.f32 %v87, %v416
  %v481 = vadd.f32 %v87, %v417
  %v482 = vadd.f32 %v87, %v418
  %v483 = vadd.f32 %v87, %v419
  %v484 = vadd.f32 %v87, %v420
  %v485 = vadd.f32 %v87, %v421
  %v486 = vadd.f32 %v87, %v422
  %v487 = vadd.f32 %v87, %v423
  %v488 = vadd.f32 %v87, %v424
  %v489 = vadd.f32 %v87, %v425
  %v490 = vadd.f32 %v87, %v426
  %v491 = vadd.f32 %v87, %v427
  %v492 = vadd.f32 %v87, %v428
  %v493 = vadd.f32 %v87, %v429
  %v494 = vadd.f32 %v87, %v430
  %v495 = vadd.f32 %v87, %v431
  %v496 = vadd.f32 %v87, %v432
  %v497 = vadd.f32 %v87, %v433
  %v498 = vadd.f32 %v87, %v434
  %v499 = vadd.f32 %v87, %v435
  %v500 = vadd.f32 %v87, %v436
  %v501 = vadd.f32 %v87, %v437
  %v502 = vadd.f32 %v87, %v438
  %v503 = vadd.f32 %v87, %v439
  %v504 = vadd.f32 %v87, %v440
  %v505 = vadd.f32 %v87, %v441
  %v506 = vadd.f32 %v87, %v442
  %v507 = vadd.f32 %v87, %v443
  %v508 = vadd.f32 %v87, %v444
  %v509 = vadd.f32 %v87, %v445
  %v510 = vadd.f32 %v87, %v446
  %v511 = vadd.f32 %v87, %v447
  %v512 = vadd.f32 %v87, %v448
  %v513 = vadd.f32 %v87, %v449
  %v514 = vadd.f32 %v87, %v450
  %v515 = vadd.f32 %v87, %v451
  %v516 = vadd.f32 %v87, %v452
  %v517 = vadd.f32 %v87, %v453
  %v518 = vadd.f32 %v87, %v454
  %v519 = vadd.f32 %v87, %v455
  %v520 = vadd.f32 %v87, %v456
  %v521 = vadd.f32 %v87, %v457
  %v522 = vadd.f32 %v87, %v458
  %v523 = vadd.f32 %v87, %v459
  %v524 = vadd.f32 %v87, %v460
  %v525 = vadd.f32 %v87, %v461
  %v526 = vadd.f32 %v87, %v462
  %v527 = vadd.f32 %v87, %v463
  %v528 = vadd.f32 %v87, %v464
  %v529 = vadd.f32 %v87, %v465
  %v530 = vadd.f32 %v87, %v466
  %v531 = vadd.f32 %v87, %v467
  %v532 = vadd.f32 %v87, %v468
  %v533 = vadd.f32 %v87, %v469
  %v534 = vadd.f32 %v87, %v470
  %v535 = vadd.f32 %v87, %v471
  %v536 = vadd.f32 %v87, %v472
  %v537 = vadd.f32 %v87, %v473
  %v538 = vadd.f32 %v87, %v474
  %v539 = vadd.f32 %v87, %v475
  %540 = vset.pattern.permute.xlu0 1
  %541 = vperm.xlu0 %540, %v15
  %v542 = vpop.permute.xlu0 %541
  %544 = vset.pattern.permute.xlu0 1
  %545 = vperm.xlu0 %544, %v16
  %v546 = vpop.permute.xlu0 %545
  %548 = vset.pattern.permute.xlu0 1
  %549 = vperm.xlu0 %548, %v17
  %v550 = vpop.permute.xlu0 %549
  %552 = vset.pattern.permute.xlu0 1
  %553 = vperm.xlu0 %552, %v18
  %v554 = vpop.permute.xlu0 %553
  %556 = vset.pattern.permute.xlu0 1
  %557 = vperm.xlu0 %556, %v19
  %v558 = vpop.permute.xlu0 %557
  %560 = vset.pattern.permute.xlu0 1
  %561 = vperm.xlu0 %560, %v20
  %v562 = vpop.permute.xlu0 %561
  %564 = vset.pattern.permute.xlu0 1
  %565 = vperm.xlu0 %564, %v21
  %v566 = vpop.permute.xlu0 %565
  %568 = vset.pattern.permute.xlu0 1
  %569 = vperm.xlu0 %568, %v22
  %v570 = vpop.permute.xlu0 %569
  %572 = vset.pattern.permute.xlu0 1
  %573 = vperm.xlu0 %572, %v23
  %v574 = vpop.permute.xlu0 %573
  %576 = vset.pattern.permute.xlu0 1
  %577 = vperm.xlu0 %576, %v24
  %v578 = vpop.permute.xlu0 %577
  %580 = vset.pattern.permute.xlu0 1
  %581 = vperm.xlu0 %580, %v25
  %v582 = vpop.permute.xlu0 %581
  %584 = vset.pattern.permute.xlu0 1
  %585 = vperm.xlu0 %584, %v26
  %v586 = vpop.permute.xlu0 %585
  %588 = vset.pattern.permute.xlu0 1
  %589 = vperm.xlu0 %588, %v27
  %v590 = vpop.permute.xlu0 %589
  %592 = vset.pattern.permute.xlu0 1
  %593 = vperm.xlu0 %592, %v28
  %v594 = vpop.permute.xlu0 %593
  %596 = vset.pattern.permute.xlu0 1
  %597 = vperm.xlu0 %596, %v29
  %v598 = vpop.permute.xlu0 %597
  %600 = vset.pattern.permute.xlu0 1
  %601 = vperm.xlu0 %600, %v30
  %v602 = vpop.permute.xlu0 %601
  %604 = vset.pattern.permute.xlu0 1
  %605 = vperm.xlu0 %604, %v31
  %v606 = vpop.permute.xlu0 %605
  %608 = vset.pattern.permute.xlu0 1
  %609 = vperm.xlu0 %608, %v32
  %v610 = vpop.permute.xlu0 %609
  %612 = vset.pattern.permute.xlu0 1
  %613 = vperm.xlu0 %612, %v33
  %v614 = vpop.permute.xlu0 %613
  %616 = vset.pattern.permute.xlu0 1
  %617 = vperm.xlu0 %616, %v34
  %v618 = vpop.permute.xlu0 %617
  %620 = vset.pattern.permute.xlu0 1
  %621 = vperm.xlu0 %620, %v35
  %v622 = vpop.permute.xlu0 %621
  %624 = vset.pattern.permute.xlu0 1
  %625 = vperm.xlu0 %624, %v36
  %v626 = vpop.permute.xlu0 %625
  %628 = vset.pattern.permute.xlu0 1
  %629 = vperm.xlu0 %628, %v37
  %v630 = vpop.permute.xlu0 %629
  %632 = vset.pattern.permute.xlu0 1
  %633 = vperm.xlu0 %632, %v38
  %v634 = vpop.permute.xlu0 %633
  %636 = vset.pattern.permute.xlu0 1
  %637 = vperm.xlu0 %636, %v39
  %v638 = vpop.permute.xlu0 %637
  %640 = vset.pattern.permute.xlu0 1
  %641 = vperm.xlu0 %640, %v40
  %v642 = vpop.permute.xlu0 %641
  %644 = vset.pattern.permute.xlu0 1
  %645 = vperm.xlu0 %644, %v41
  %v646 = vpop.permute.xlu0 %645
  %648 = vset.pattern.permute.xlu0 1
  %649 = vperm.xlu0 %648, %v42
  %v650 = vpop.permute.xlu0 %649
  %652 = vset.pattern.permute.xlu0 1
  %653 = vperm.xlu0 %652, %v43
  %v654 = vpop.permute.xlu0 %653
  %656 = vset.pattern.permute.xlu0 1
  %657 = vperm.xlu0 %656, %v44
  %v658 = vpop.permute.xlu0 %657
  %660 = vset.pattern.permute.xlu0 1
  %661 = vperm.xlu0 %660, %v45
  %v662 = vpop.permute.xlu0 %661
  %664 = vset.pattern.permute.xlu0 1
  %665 = vperm.xlu0 %664, %v46
  %v666 = vpop.permute.xlu0 %665
  %668 = vset.pattern.permute.xlu0 1
  %669 = vperm.xlu0 %668, %v47
  %v670 = vpop.permute.xlu0 %669
  %672 = vset.pattern.permute.xlu0 1
  %673 = vperm.xlu0 %672, %v48
  %v674 = vpop.permute.xlu0 %673
  %676 = vset.pattern.permute.xlu0 1
  %677 = vperm.xlu0 %676, %v49
  %v678 = vpop.permute.xlu0 %677
  %680 = vset.pattern.permute.xlu0 1
  %681 = vperm.xlu0 %680, %v50
  %v682 = vpop.permute.xlu0 %681
  %684 = vset.pattern.permute.xlu0 1
  %685 = vperm.xlu0 %684, %v51
  %v686 = vpop.permute.xlu0 %685
  %688 = vset.pattern.permute.xlu0 1
  %689 = vperm.xlu0 %688, %v52
  %v690 = vpop.permute.xlu0 %689
  %692 = vset.pattern.permute.xlu0 1
  %693 = vperm.xlu0 %692, %v53
  %v694 = vpop.permute.xlu0 %693
  %696 = vset.pattern.permute.xlu0 1
  %697 = vperm.xlu0 %696, %v54
  %v698 = vpop.permute.xlu0 %697
  %700 = vset.pattern.permute.xlu0 1
  %701 = vperm.xlu0 %700, %v55
  %v702 = vpop.permute.xlu0 %701
  %704 = vset.pattern.permute.xlu0 1
  %705 = vperm.xlu0 %704, %v56
  %v706 = vpop.permute.xlu0 %705
  %708 = vset.pattern.permute.xlu0 1
  %709 = vperm.xlu0 %708, %v57
  %v710 = vpop.permute.xlu0 %709
  %712 = vset.pattern.permute.xlu0 1
  %713 = vperm.xlu0 %712, %v58
  %v714 = vpop.permute.xlu0 %713
  %716 = vset.pattern.permute.xlu0 1
  %717 = vperm.xlu0 %716, %v59
  %v718 = vpop.permute.xlu0 %717
  %720 = vset.pattern.permute.xlu0 1
  %721 = vperm.xlu0 %720, %v60
  %v722 = vpop.permute.xlu0 %721
  %724 = vset.pattern.permute.xlu0 1
  %725 = vperm.xlu0 %724, %v61
  %v726 = vpop.permute.xlu0 %725
  %728 = vset.pattern.permute.xlu0 1
  %729 = vperm.xlu0 %728, %v62
  %v730 = vpop.permute.xlu0 %729
  %732 = vset.pattern.permute.xlu0 1
  %733 = vperm.xlu0 %732, %v63
  %v734 = vpop.permute.xlu0 %733
  %736 = vset.pattern.permute.xlu0 1
  %737 = vperm.xlu0 %736, %v64
  %v738 = vpop.permute.xlu0 %737
  %740 = vset.pattern.permute.xlu0 1
  %741 = vperm.xlu0 %740, %v65
  %v742 = vpop.permute.xlu0 %741
  %744 = vset.pattern.permute.xlu0 1
  %745 = vperm.xlu0 %744, %v66
  %v746 = vpop.permute.xlu0 %745
  %748 = vset.pattern.permute.xlu0 1
  %749 = vperm.xlu0 %748, %v67
  %v750 = vpop.permute.xlu0 %749
  %752 = vset.pattern.permute.xlu0 1
  %753 = vperm.xlu0 %752, %v68
  %v754 = vpop.permute.xlu0 %753
  %756 = vset.pattern.permute.xlu0 1
  %757 = vperm.xlu0 %756, %v69
  %v758 = vpop.permute.xlu0 %757
  %760 = vset.pattern.permute.xlu0 1
  %761 = vperm.xlu0 %760, %v70
  %v762 = vpop.permute.xlu0 %761
  %764 = vset.pattern.permute.xlu0 1
  %765 = vperm.xlu0 %764, %v71
  %v766 = vpop.permute.xlu0 %765
  %768 = vset.pattern.permute.xlu0 1
  %769 = vperm.xlu0 %768, %v72
  %v770 = vpop.permute.xlu0 %769
  %772 = vset.pattern.permute.xlu0 1
  %773 = vperm.xlu0 %772, %v73
  %v774 = vpop.permute.xlu0 %773
  %776 = vset.pattern.permute.xlu0 1
  %777 = vperm.xlu0 %776, %v74
  %v778 = vpop.permute.xlu0 %777
  %780 = vset.pattern.permute.xlu0 1
  %781 = vperm.xlu0 %780, %v75
  %v782 = vpop.permute.xlu0 %781
  %784 = vset.pattern.permute.xlu0 1
  %785 = vperm.xlu0 %784, %v76
  %v786 = vpop.permute.xlu0 %785
  %788 = vset.pattern.permute.xlu0 1
  %789 = vperm.xlu0 %788, %v77
  %v790 = vpop.permute.xlu0 %789
  %792 = vset.pattern.permute.xlu0 1
  %793 = vperm.xlu0 %792, %v78
  %v794 = vpop.permute.xlu0 %793
  %v796 = vlaneseq
  %v797 = vshrl.u32 %v796, 7
  %v798 = vsub.s32 1, %v797
  %v799 = vrot.slane %v80, %v798
  %v800 = vmul.f32 %v542, %v799
  %v801 = vmul.f32 %v546, %v799
  %v802 = vmul.f32 %v550, %v799
  %v803 = vmul.f32 %v554, %v799
  %v804 = vmul.f32 %v558, %v799
  %v805 = vmul.f32 %v562, %v799
  %v806 = vmul.f32 %v566, %v799
  %v807 = vmul.f32 %v570, %v799
  %v808 = vmul.f32 %v574, %v799
  %v809 = vmul.f32 %v578, %v799
  %v810 = vmul.f32 %v582, %v799
  %v811 = vmul.f32 %v586, %v799
  %v812 = vmul.f32 %v590, %v799
  %v813 = vmul.f32 %v594, %v799
  %v814 = vmul.f32 %v598, %v799
  %v815 = vmul.f32 %v602, %v799
  %v816 = vmul.f32 %v606, %v799
  %v817 = vmul.f32 %v610, %v799
  %v818 = vmul.f32 %v614, %v799
  %v819 = vmul.f32 %v618, %v799
  %v820 = vmul.f32 %v622, %v799
  %v821 = vmul.f32 %v626, %v799
  %v822 = vmul.f32 %v630, %v799
  %v823 = vmul.f32 %v634, %v799
  %v824 = vmul.f32 %v638, %v799
  %v825 = vmul.f32 %v642, %v799
  %v826 = vmul.f32 %v646, %v799
  %v827 = vmul.f32 %v650, %v799
  %v828 = vmul.f32 %v654, %v799
  %v829 = vmul.f32 %v658, %v799
  %v830 = vmul.f32 %v662, %v799
  %v831 = vmul.f32 %v666, %v799
  %v832 = vmul.f32 %v670, %v799
  %v833 = vmul.f32 %v674, %v799
  %v834 = vmul.f32 %v678, %v799
  %v835 = vmul.f32 %v682, %v799
  %v836 = vmul.f32 %v686, %v799
  %v837 = vmul.f32 %v690, %v799
  %v838 = vmul.f32 %v694, %v799
  %v839 = vmul.f32 %v698, %v799
  %v840 = vmul.f32 %v702, %v799
  %v841 = vmul.f32 %v706, %v799
  %v842 = vmul.f32 %v710, %v799
  %v843 = vmul.f32 %v714, %v799
  %v844 = vmul.f32 %v718, %v799
  %v845 = vmul.f32 %v722, %v799
  %v846 = vmul.f32 %v726, %v799
  %v847 = vmul.f32 %v730, %v799
  %v848 = vmul.f32 %v734, %v799
  %v849 = vmul.f32 %v738, %v799
  %v850 = vmul.f32 %v742, %v799
  %v851 = vmul.f32 %v746, %v799
  %v852 = vmul.f32 %v750, %v799
  %v853 = vmul.f32 %v754, %v799
  %v854 = vmul.f32 %v758, %v799
  %v855 = vmul.f32 %v762, %v799
  %v856 = vmul.f32 %v766, %v799
  %v857 = vmul.f32 %v770, %v799
  %v858 = vmul.f32 %v774, %v799
  %v859 = vmul.f32 %v778, %v799
  %v860 = vmul.f32 %v782, %v799
  %v861 = vmul.f32 %v786, %v799
  %v862 = vmul.f32 %v790, %v799
  %v863 = vmul.f32 %v794, %v799
  %v864 = vadd.f32 %v476, %v800
  %v865 = vadd.f32 %v477, %v801
  %v866 = vadd.f32 %v478, %v802
  %v867 = vadd.f32 %v479, %v803
  %v868 = vadd.f32 %v480, %v804
  %v869 = vadd.f32 %v481, %v805
  %v870 = vadd.f32 %v482, %v806
  %v871 = vadd.f32 %v483, %v807
  %v872 = vadd.f32 %v484, %v808
  %v873 = vadd.f32 %v485, %v809
  %v874 = vadd.f32 %v486, %v810
  %v875 = vadd.f32 %v487, %v811
  %v876 = vadd.f32 %v488, %v812
  %v877 = vadd.f32 %v489, %v813
  %v878 = vadd.f32 %v490, %v814
  %v879 = vadd.f32 %v491, %v815
  %v880 = vadd.f32 %v492, %v816
  %v881 = vadd.f32 %v493, %v817
  %v882 = vadd.f32 %v494, %v818
  %v883 = vadd.f32 %v495, %v819
  %v884 = vadd.f32 %v496, %v820
  %v885 = vadd.f32 %v497, %v821
  %v886 = vadd.f32 %v498, %v822
  %v887 = vadd.f32 %v499, %v823
  %v888 = vadd.f32 %v500, %v824
  %v889 = vadd.f32 %v501, %v825
  %v890 = vadd.f32 %v502, %v826
  %v891 = vadd.f32 %v503, %v827
  %v892 = vadd.f32 %v504, %v828
  %v893 = vadd.f32 %v505, %v829
  %v894 = vadd.f32 %v506, %v830
  %v895 = vadd.f32 %v507, %v831
  %v896 = vadd.f32 %v508, %v832
  %v897 = vadd.f32 %v509, %v833
  %v898 = vadd.f32 %v510, %v834
  %v899 = vadd.f32 %v511, %v835
  %v900 = vadd.f32 %v512, %v836
  %v901 = vadd.f32 %v513, %v837
  %v902 = vadd.f32 %v514, %v838
  %v903 = vadd.f32 %v515, %v839
  %v904 = vadd.f32 %v516, %v840
  %v905 = vadd.f32 %v517, %v841
  %v906 = vadd.f32 %v518, %v842
  %v907 = vadd.f32 %v519, %v843
  %v908 = vadd.f32 %v520, %v844
  %v909 = vadd.f32 %v521, %v845
  %v910 = vadd.f32 %v522, %v846
  %v911 = vadd.f32 %v523, %v847
  %v912 = vadd.f32 %v524, %v848
  %v913 = vadd.f32 %v525, %v849
  %v914 = vadd.f32 %v526, %v850
  %v915 = vadd.f32 %v527, %v851
  %v916 = vadd.f32 %v528, %v852
  %v917 = vadd.f32 %v529, %v853
  %v918 = vadd.f32 %v530, %v854
  %v919 = vadd.f32 %v531, %v855
  %v920 = vadd.f32 %v532, %v856
  %v921 = vadd.f32 %v533, %v857
  %v922 = vadd.f32 %v534, %v858
  %v923 = vadd.f32 %v535, %v859
  %v924 = vadd.f32 %v536, %v860
  %v925 = vadd.f32 %v537, %v861
  %v926 = vadd.f32 %v538, %v862
  %v927 = vadd.f32 %v539, %v863
  %928 = vset.pattern.permute.xlu0 2
  %929 = vperm.xlu0 %928, %v15
  %v930 = vpop.permute.xlu0 %929
  %932 = vset.pattern.permute.xlu0 2
  %933 = vperm.xlu0 %932, %v16
  %v934 = vpop.permute.xlu0 %933
  %936 = vset.pattern.permute.xlu0 2
  %937 = vperm.xlu0 %936, %v17
  %v938 = vpop.permute.xlu0 %937
  %940 = vset.pattern.permute.xlu0 2
  %941 = vperm.xlu0 %940, %v18
  %v942 = vpop.permute.xlu0 %941
  %944 = vset.pattern.permute.xlu0 2
  %945 = vperm.xlu0 %944, %v19
  %v946 = vpop.permute.xlu0 %945
  %948 = vset.pattern.permute.xlu0 2
  %949 = vperm.xlu0 %948, %v20
  %v950 = vpop.permute.xlu0 %949
  %952 = vset.pattern.permute.xlu0 2
  %953 = vperm.xlu0 %952, %v21
  %v954 = vpop.permute.xlu0 %953
  %956 = vset.pattern.permute.xlu0 2
  %957 = vperm.xlu0 %956, %v22
  %v958 = vpop.permute.xlu0 %957
  %960 = vset.pattern.permute.xlu0 2
  %961 = vperm.xlu0 %960, %v23
  %v962 = vpop.permute.xlu0 %961
  %964 = vset.pattern.permute.xlu0 2
  %965 = vperm.xlu0 %964, %v24
  %v966 = vpop.permute.xlu0 %965
  %968 = vset.pattern.permute.xlu0 2
  %969 = vperm.xlu0 %968, %v25
  %v970 = vpop.permute.xlu0 %969
  %972 = vset.pattern.permute.xlu0 2
  %973 = vperm.xlu0 %972, %v26
  %v974 = vpop.permute.xlu0 %973
  %976 = vset.pattern.permute.xlu0 2
  %977 = vperm.xlu0 %976, %v27
  %v978 = vpop.permute.xlu0 %977
  %980 = vset.pattern.permute.xlu0 2
  %981 = vperm.xlu0 %980, %v28
  %v982 = vpop.permute.xlu0 %981
  %984 = vset.pattern.permute.xlu0 2
  %985 = vperm.xlu0 %984, %v29
  %v986 = vpop.permute.xlu0 %985
  %988 = vset.pattern.permute.xlu0 2
  %989 = vperm.xlu0 %988, %v30
  %v990 = vpop.permute.xlu0 %989
  %992 = vset.pattern.permute.xlu0 2
  %993 = vperm.xlu0 %992, %v31
  %v994 = vpop.permute.xlu0 %993
  %996 = vset.pattern.permute.xlu0 2
  %997 = vperm.xlu0 %996, %v32
  %v998 = vpop.permute.xlu0 %997
  %1000 = vset.pattern.permute.xlu0 2
  %1001 = vperm.xlu0 %1000, %v33
  %v1002 = vpop.permute.xlu0 %1001
  %1004 = vset.pattern.permute.xlu0 2
  %1005 = vperm.xlu0 %1004, %v34
  %v1006 = vpop.permute.xlu0 %1005
  %1008 = vset.pattern.permute.xlu0 2
  %1009 = vperm.xlu0 %1008, %v35
  %v1010 = vpop.permute.xlu0 %1009
  %1012 = vset.pattern.permute.xlu0 2
  %1013 = vperm.xlu0 %1012, %v36
  %v1014 = vpop.permute.xlu0 %1013
  %1016 = vset.pattern.permute.xlu0 2
  %1017 = vperm.xlu0 %1016, %v37
  %v1018 = vpop.permute.xlu0 %1017
  %1020 = vset.pattern.permute.xlu0 2
  %1021 = vperm.xlu0 %1020, %v38
  %v1022 = vpop.permute.xlu0 %1021
  %1024 = vset.pattern.permute.xlu0 2
  %1025 = vperm.xlu0 %1024, %v39
  %v1026 = vpop.permute.xlu0 %1025
  %1028 = vset.pattern.permute.xlu0 2
  %1029 = vperm.xlu0 %1028, %v40
  %v1030 = vpop.permute.xlu0 %1029
  %1032 = vset.pattern.permute.xlu0 2
  %1033 = vperm.xlu0 %1032, %v41
  %v1034 = vpop.permute.xlu0 %1033
  %1036 = vset.pattern.permute.xlu0 2
  %1037 = vperm.xlu0 %1036, %v42
  %v1038 = vpop.permute.xlu0 %1037
  %1040 = vset.pattern.permute.xlu0 2
  %1041 = vperm.xlu0 %1040, %v43
  %v1042 = vpop.permute.xlu0 %1041
  %1044 = vset.pattern.permute.xlu0 2
  %1045 = vperm.xlu0 %1044, %v44
  %v1046 = vpop.permute.xlu0 %1045
  %1048 = vset.pattern.permute.xlu0 2
  %1049 = vperm.xlu0 %1048, %v45
  %v1050 = vpop.permute.xlu0 %1049
  %1052 = vset.pattern.permute.xlu0 2
  %1053 = vperm.xlu0 %1052, %v46
  %v1054 = vpop.permute.xlu0 %1053
  %1056 = vset.pattern.permute.xlu0 2
  %1057 = vperm.xlu0 %1056, %v47
  %v1058 = vpop.permute.xlu0 %1057
  %1060 = vset.pattern.permute.xlu0 2
  %1061 = vperm.xlu0 %1060, %v48
  %v1062 = vpop.permute.xlu0 %1061
  %1064 = vset.pattern.permute.xlu0 2
  %1065 = vperm.xlu0 %1064, %v49
  %v1066 = vpop.permute.xlu0 %1065
  %1068 = vset.pattern.permute.xlu0 2
  %1069 = vperm.xlu0 %1068, %v50
  %v1070 = vpop.permute.xlu0 %1069
  %1072 = vset.pattern.permute.xlu0 2
  %1073 = vperm.xlu0 %1072, %v51
  %v1074 = vpop.permute.xlu0 %1073
  %1076 = vset.pattern.permute.xlu0 2
  %1077 = vperm.xlu0 %1076, %v52
  %v1078 = vpop.permute.xlu0 %1077
  %1080 = vset.pattern.permute.xlu0 2
  %1081 = vperm.xlu0 %1080, %v53
  %v1082 = vpop.permute.xlu0 %1081
  %1084 = vset.pattern.permute.xlu0 2
  %1085 = vperm.xlu0 %1084, %v54
  %v1086 = vpop.permute.xlu0 %1085
  %1088 = vset.pattern.permute.xlu0 2
  %1089 = vperm.xlu0 %1088, %v55
  %v1090 = vpop.permute.xlu0 %1089
  %1092 = vset.pattern.permute.xlu0 2
  %1093 = vperm.xlu0 %1092, %v56
  %v1094 = vpop.permute.xlu0 %1093
  %1096 = vset.pattern.permute.xlu0 2
  %1097 = vperm.xlu0 %1096, %v57
  %v1098 = vpop.permute.xlu0 %1097
  %1100 = vset.pattern.permute.xlu0 2
  %1101 = vperm.xlu0 %1100, %v58
  %v1102 = vpop.permute.xlu0 %1101
  %1104 = vset.pattern.permute.xlu0 2
  %1105 = vperm.xlu0 %1104, %v59
  %v1106 = vpop.permute.xlu0 %1105
  %1108 = vset.pattern.permute.xlu0 2
  %1109 = vperm.xlu0 %1108, %v60
  %v1110 = vpop.permute.xlu0 %1109
  %1112 = vset.pattern.permute.xlu0 2
  %1113 = vperm.xlu0 %1112, %v61
  %v1114 = vpop.permute.xlu0 %1113
  %1116 = vset.pattern.permute.xlu0 2
  %1117 = vperm.xlu0 %1116, %v62
  %v1118 = vpop.permute.xlu0 %1117
  %1120 = vset.pattern.permute.xlu0 2
  %1121 = vperm.xlu0 %1120, %v63
  %v1122 = vpop.permute.xlu0 %1121
  %1124 = vset.pattern.permute.xlu0 2
  %1125 = vperm.xlu0 %1124, %v64
  %v1126 = vpop.permute.xlu0 %1125
  %1128 = vset.pattern.permute.xlu0 2
  %1129 = vperm.xlu0 %1128, %v65
  %v1130 = vpop.permute.xlu0 %1129
  %1132 = vset.pattern.permute.xlu0 2
  %1133 = vperm.xlu0 %1132, %v66
  %v1134 = vpop.permute.xlu0 %1133
  %1136 = vset.pattern.permute.xlu0 2
  %1137 = vperm.xlu0 %1136, %v67
  %v1138 = vpop.permute.xlu0 %1137
  %1140 = vset.pattern.permute.xlu0 2
  %1141 = vperm.xlu0 %1140, %v68
  %v1142 = vpop.permute.xlu0 %1141
  %1144 = vset.pattern.permute.xlu0 2
  %1145 = vperm.xlu0 %1144, %v69
  %v1146 = vpop.permute.xlu0 %1145
  %1148 = vset.pattern.permute.xlu0 2
  %1149 = vperm.xlu0 %1148, %v70
  %v1150 = vpop.permute.xlu0 %1149
  %1152 = vset.pattern.permute.xlu0 2
  %1153 = vperm.xlu0 %1152, %v71
  %v1154 = vpop.permute.xlu0 %1153
  %1156 = vset.pattern.permute.xlu0 2
  %1157 = vperm.xlu0 %1156, %v72
  %v1158 = vpop.permute.xlu0 %1157
  %1160 = vset.pattern.permute.xlu0 2
  %1161 = vperm.xlu0 %1160, %v73
  %v1162 = vpop.permute.xlu0 %1161
  %1164 = vset.pattern.permute.xlu0 2
  %1165 = vperm.xlu0 %1164, %v74
  %v1166 = vpop.permute.xlu0 %1165
  %1168 = vset.pattern.permute.xlu0 2
  %1169 = vperm.xlu0 %1168, %v75
  %v1170 = vpop.permute.xlu0 %1169
  %1172 = vset.pattern.permute.xlu0 2
  %1173 = vperm.xlu0 %1172, %v76
  %v1174 = vpop.permute.xlu0 %1173
  %1176 = vset.pattern.permute.xlu0 2
  %1177 = vperm.xlu0 %1176, %v77
  %v1178 = vpop.permute.xlu0 %1177
  %1180 = vset.pattern.permute.xlu0 2
  %1181 = vperm.xlu0 %1180, %v78
  %v1182 = vpop.permute.xlu0 %1181
  %v1184 = vlaneseq
  %v1185 = vshrl.u32 %v1184, 7
  %v1186 = vsub.s32 2, %v1185
  %v1187 = vrot.slane %v80, %v1186
  %v1188 = vmul.f32 %v930, %v1187
  %v1189 = vmul.f32 %v934, %v1187
  %v1190 = vmul.f32 %v938, %v1187
  %v1191 = vmul.f32 %v942, %v1187
  %v1192 = vmul.f32 %v946, %v1187
  %v1193 = vmul.f32 %v950, %v1187
  %v1194 = vmul.f32 %v954, %v1187
  %v1195 = vmul.f32 %v958, %v1187
  %v1196 = vmul.f32 %v962, %v1187
  %v1197 = vmul.f32 %v966, %v1187
  %v1198 = vmul.f32 %v970, %v1187
  %v1199 = vmul.f32 %v974, %v1187
  %v1200 = vmul.f32 %v978, %v1187
  %v1201 = vmul.f32 %v982, %v1187
  %v1202 = vmul.f32 %v986, %v1187
  %v1203 = vmul.f32 %v990, %v1187
  %v1204 = vmul.f32 %v994, %v1187
  %v1205 = vmul.f32 %v998, %v1187
  %v1206 = vmul.f32 %v1002, %v1187
  %v1207 = vmul.f32 %v1006, %v1187
  %v1208 = vmul.f32 %v1010, %v1187
  %v1209 = vmul.f32 %v1014, %v1187
  %v1210 = vmul.f32 %v1018, %v1187
  %v1211 = vmul.f32 %v1022, %v1187
  %v1212 = vmul.f32 %v1026, %v1187
  %v1213 = vmul.f32 %v1030, %v1187
  %v1214 = vmul.f32 %v1034, %v1187
  %v1215 = vmul.f32 %v1038, %v1187
  %v1216 = vmul.f32 %v1042, %v1187
  %v1217 = vmul.f32 %v1046, %v1187
  %v1218 = vmul.f32 %v1050, %v1187
  %v1219 = vmul.f32 %v1054, %v1187
  %v1220 = vmul.f32 %v1058, %v1187
  %v1221 = vmul.f32 %v1062, %v1187
  %v1222 = vmul.f32 %v1066, %v1187
  %v1223 = vmul.f32 %v1070, %v1187
  %v1224 = vmul.f32 %v1074, %v1187
  %v1225 = vmul.f32 %v1078, %v1187
  %v1226 = vmul.f32 %v1082, %v1187
  %v1227 = vmul.f32 %v1086, %v1187
  %v1228 = vmul.f32 %v1090, %v1187
  %v1229 = vmul.f32 %v1094, %v1187
  %v1230 = vmul.f32 %v1098, %v1187
  %v1231 = vmul.f32 %v1102, %v1187
  %v1232 = vmul.f32 %v1106, %v1187
  %v1233 = vmul.f32 %v1110, %v1187
  %v1234 = vmul.f32 %v1114, %v1187
  %v1235 = vmul.f32 %v1118, %v1187
  %v1236 = vmul.f32 %v1122, %v1187
  %v1237 = vmul.f32 %v1126, %v1187
  %v1238 = vmul.f32 %v1130, %v1187
  %v1239 = vmul.f32 %v1134, %v1187
  %v1240 = vmul.f32 %v1138, %v1187
  %v1241 = vmul.f32 %v1142, %v1187
  %v1242 = vmul.f32 %v1146, %v1187
  %v1243 = vmul.f32 %v1150, %v1187
  %v1244 = vmul.f32 %v1154, %v1187
  %v1245 = vmul.f32 %v1158, %v1187
  %v1246 = vmul.f32 %v1162, %v1187
  %v1247 = vmul.f32 %v1166, %v1187
  %v1248 = vmul.f32 %v1170, %v1187
  %v1249 = vmul.f32 %v1174, %v1187
  %v1250 = vmul.f32 %v1178, %v1187
  %v1251 = vmul.f32 %v1182, %v1187
  %v1252 = vadd.f32 %v864, %v1188
  %v1253 = vadd.f32 %v865, %v1189
  %v1254 = vadd.f32 %v866, %v1190
  %v1255 = vadd.f32 %v867, %v1191
  %v1256 = vadd.f32 %v868, %v1192
  %v1257 = vadd.f32 %v869, %v1193
  %v1258 = vadd.f32 %v870, %v1194
  %v1259 = vadd.f32 %v871, %v1195
  %v1260 = vadd.f32 %v872, %v1196
  %v1261 = vadd.f32 %v873, %v1197
  %v1262 = vadd.f32 %v874, %v1198
  %v1263 = vadd.f32 %v875, %v1199
  %v1264 = vadd.f32 %v876, %v1200
  %v1265 = vadd.f32 %v877, %v1201
  %v1266 = vadd.f32 %v878, %v1202
  %v1267 = vadd.f32 %v879, %v1203
  %v1268 = vadd.f32 %v880, %v1204
  %v1269 = vadd.f32 %v881, %v1205
  %v1270 = vadd.f32 %v882, %v1206
  %v1271 = vadd.f32 %v883, %v1207
  %v1272 = vadd.f32 %v884, %v1208
  %v1273 = vadd.f32 %v885, %v1209
  %v1274 = vadd.f32 %v886, %v1210
  %v1275 = vadd.f32 %v887, %v1211
  %v1276 = vadd.f32 %v888, %v1212
  %v1277 = vadd.f32 %v889, %v1213
  %v1278 = vadd.f32 %v890, %v1214
  %v1279 = vadd.f32 %v891, %v1215
  %v1280 = vadd.f32 %v892, %v1216
  %v1281 = vadd.f32 %v893, %v1217
  %v1282 = vadd.f32 %v894, %v1218
  %v1283 = vadd.f32 %v895, %v1219
  %v1284 = vadd.f32 %v896, %v1220
  %v1285 = vadd.f32 %v897, %v1221
  %v1286 = vadd.f32 %v898, %v1222
  %v1287 = vadd.f32 %v899, %v1223
  %v1288 = vadd.f32 %v900, %v1224
  %v1289 = vadd.f32 %v901, %v1225
  %v1290 = vadd.f32 %v902, %v1226
  %v1291 = vadd.f32 %v903, %v1227
  %v1292 = vadd.f32 %v904, %v1228
  %v1293 = vadd.f32 %v905, %v1229
  %v1294 = vadd.f32 %v906, %v1230
  %v1295 = vadd.f32 %v907, %v1231
  %v1296 = vadd.f32 %v908, %v1232
  %v1297 = vadd.f32 %v909, %v1233
  %v1298 = vadd.f32 %v910, %v1234
  %v1299 = vadd.f32 %v911, %v1235
  %v1300 = vadd.f32 %v912, %v1236
  %v1301 = vadd.f32 %v913, %v1237
  %v1302 = vadd.f32 %v914, %v1238
  %v1303 = vadd.f32 %v915, %v1239
  %v1304 = vadd.f32 %v916, %v1240
  %v1305 = vadd.f32 %v917, %v1241
  %v1306 = vadd.f32 %v918, %v1242
  %v1307 = vadd.f32 %v919, %v1243
  %v1308 = vadd.f32 %v920, %v1244
  %v1309 = vadd.f32 %v921, %v1245
  %v1310 = vadd.f32 %v922, %v1246
  %v1311 = vadd.f32 %v923, %v1247
  %v1312 = vadd.f32 %v924, %v1248
  %v1313 = vadd.f32 %v925, %v1249
  %v1314 = vadd.f32 %v926, %v1250
  %v1315 = vadd.f32 %v927, %v1251
  %1316 = vset.pattern.permute.xlu0 3
  %1317 = vperm.xlu0 %1316, %v15
  %v1318 = vpop.permute.xlu0 %1317
  %1320 = vset.pattern.permute.xlu0 3
  %1321 = vperm.xlu0 %1320, %v16
  %v1322 = vpop.permute.xlu0 %1321
  %1324 = vset.pattern.permute.xlu0 3
  %1325 = vperm.xlu0 %1324, %v17
  %v1326 = vpop.permute.xlu0 %1325
  %1328 = vset.pattern.permute.xlu0 3
  %1329 = vperm.xlu0 %1328, %v18
  %v1330 = vpop.permute.xlu0 %1329
  %1332 = vset.pattern.permute.xlu0 3
  %1333 = vperm.xlu0 %1332, %v19
  %v1334 = vpop.permute.xlu0 %1333
  %1336 = vset.pattern.permute.xlu0 3
  %1337 = vperm.xlu0 %1336, %v20
  %v1338 = vpop.permute.xlu0 %1337
  %1340 = vset.pattern.permute.xlu0 3
  %1341 = vperm.xlu0 %1340, %v21
  %v1342 = vpop.permute.xlu0 %1341
  %1344 = vset.pattern.permute.xlu0 3
  %1345 = vperm.xlu0 %1344, %v22
  %v1346 = vpop.permute.xlu0 %1345
  %1348 = vset.pattern.permute.xlu0 3
  %1349 = vperm.xlu0 %1348, %v23
  %v1350 = vpop.permute.xlu0 %1349
  %1352 = vset.pattern.permute.xlu0 3
  %1353 = vperm.xlu0 %1352, %v24
  %v1354 = vpop.permute.xlu0 %1353
  %1356 = vset.pattern.permute.xlu0 3
  %1357 = vperm.xlu0 %1356, %v25
  %v1358 = vpop.permute.xlu0 %1357
  %1360 = vset.pattern.permute.xlu0 3
  %1361 = vperm.xlu0 %1360, %v26
  %v1362 = vpop.permute.xlu0 %1361
  %1364 = vset.pattern.permute.xlu0 3
  %1365 = vperm.xlu0 %1364, %v27
  %v1366 = vpop.permute.xlu0 %1365
  %1368 = vset.pattern.permute.xlu0 3
  %1369 = vperm.xlu0 %1368, %v28
  %v1370 = vpop.permute.xlu0 %1369
  %1372 = vset.pattern.permute.xlu0 3
  %1373 = vperm.xlu0 %1372, %v29
  %v1374 = vpop.permute.xlu0 %1373
  %1376 = vset.pattern.permute.xlu0 3
  %1377 = vperm.xlu0 %1376, %v30
  %v1378 = vpop.permute.xlu0 %1377
  %1380 = vset.pattern.permute.xlu0 3
  %1381 = vperm.xlu0 %1380, %v31
  %v1382 = vpop.permute.xlu0 %1381
  %1384 = vset.pattern.permute.xlu0 3
  %1385 = vperm.xlu0 %1384, %v32
  %v1386 = vpop.permute.xlu0 %1385
  %1388 = vset.pattern.permute.xlu0 3
  %1389 = vperm.xlu0 %1388, %v33
  %v1390 = vpop.permute.xlu0 %1389
  %1392 = vset.pattern.permute.xlu0 3
  %1393 = vperm.xlu0 %1392, %v34
  %v1394 = vpop.permute.xlu0 %1393
  %1396 = vset.pattern.permute.xlu0 3
  %1397 = vperm.xlu0 %1396, %v35
  %v1398 = vpop.permute.xlu0 %1397
  %1400 = vset.pattern.permute.xlu0 3
  %1401 = vperm.xlu0 %1400, %v36
  %v1402 = vpop.permute.xlu0 %1401
  %1404 = vset.pattern.permute.xlu0 3
  %1405 = vperm.xlu0 %1404, %v37
  %v1406 = vpop.permute.xlu0 %1405
  %1408 = vset.pattern.permute.xlu0 3
  %1409 = vperm.xlu0 %1408, %v38
  %v1410 = vpop.permute.xlu0 %1409
  %1412 = vset.pattern.permute.xlu0 3
  %1413 = vperm.xlu0 %1412, %v39
  %v1414 = vpop.permute.xlu0 %1413
  %1416 = vset.pattern.permute.xlu0 3
  %1417 = vperm.xlu0 %1416, %v40
  %v1418 = vpop.permute.xlu0 %1417
  %1420 = vset.pattern.permute.xlu0 3
  %1421 = vperm.xlu0 %1420, %v41
  %v1422 = vpop.permute.xlu0 %1421
  %1424 = vset.pattern.permute.xlu0 3
  %1425 = vperm.xlu0 %1424, %v42
  %v1426 = vpop.permute.xlu0 %1425
  %1428 = vset.pattern.permute.xlu0 3
  %1429 = vperm.xlu0 %1428, %v43
  %v1430 = vpop.permute.xlu0 %1429
  %1432 = vset.pattern.permute.xlu0 3
  %1433 = vperm.xlu0 %1432, %v44
  %v1434 = vpop.permute.xlu0 %1433
  %1436 = vset.pattern.permute.xlu0 3
  %1437 = vperm.xlu0 %1436, %v45
  %v1438 = vpop.permute.xlu0 %1437
  %1440 = vset.pattern.permute.xlu0 3
  %1441 = vperm.xlu0 %1440, %v46
  %v1442 = vpop.permute.xlu0 %1441
  %1444 = vset.pattern.permute.xlu0 3
  %1445 = vperm.xlu0 %1444, %v47
  %v1446 = vpop.permute.xlu0 %1445
  %1448 = vset.pattern.permute.xlu0 3
  %1449 = vperm.xlu0 %1448, %v48
  %v1450 = vpop.permute.xlu0 %1449
  %1452 = vset.pattern.permute.xlu0 3
  %1453 = vperm.xlu0 %1452, %v49
  %v1454 = vpop.permute.xlu0 %1453
  %1456 = vset.pattern.permute.xlu0 3
  %1457 = vperm.xlu0 %1456, %v50
  %v1458 = vpop.permute.xlu0 %1457
  %1460 = vset.pattern.permute.xlu0 3
  %1461 = vperm.xlu0 %1460, %v51
  %v1462 = vpop.permute.xlu0 %1461
  %1464 = vset.pattern.permute.xlu0 3
  %1465 = vperm.xlu0 %1464, %v52
  %v1466 = vpop.permute.xlu0 %1465
  %1468 = vset.pattern.permute.xlu0 3
  %1469 = vperm.xlu0 %1468, %v53
  %v1470 = vpop.permute.xlu0 %1469
  %1472 = vset.pattern.permute.xlu0 3
  %1473 = vperm.xlu0 %1472, %v54
  %v1474 = vpop.permute.xlu0 %1473
  %1476 = vset.pattern.permute.xlu0 3
  %1477 = vperm.xlu0 %1476, %v55
  %v1478 = vpop.permute.xlu0 %1477
  %1480 = vset.pattern.permute.xlu0 3
  %1481 = vperm.xlu0 %1480, %v56
  %v1482 = vpop.permute.xlu0 %1481
  %1484 = vset.pattern.permute.xlu0 3
  %1485 = vperm.xlu0 %1484, %v57
  %v1486 = vpop.permute.xlu0 %1485
  %1488 = vset.pattern.permute.xlu0 3
  %1489 = vperm.xlu0 %1488, %v58
  %v1490 = vpop.permute.xlu0 %1489
  %1492 = vset.pattern.permute.xlu0 3
  %1493 = vperm.xlu0 %1492, %v59
  %v1494 = vpop.permute.xlu0 %1493
  %1496 = vset.pattern.permute.xlu0 3
  %1497 = vperm.xlu0 %1496, %v60
  %v1498 = vpop.permute.xlu0 %1497
  %1500 = vset.pattern.permute.xlu0 3
  %1501 = vperm.xlu0 %1500, %v61
  %v1502 = vpop.permute.xlu0 %1501
  %1504 = vset.pattern.permute.xlu0 3
  %1505 = vperm.xlu0 %1504, %v62
  %v1506 = vpop.permute.xlu0 %1505
  %1508 = vset.pattern.permute.xlu0 3
  %1509 = vperm.xlu0 %1508, %v63
  %v1510 = vpop.permute.xlu0 %1509
  %1512 = vset.pattern.permute.xlu0 3
  %1513 = vperm.xlu0 %1512, %v64
  %v1514 = vpop.permute.xlu0 %1513
  %1516 = vset.pattern.permute.xlu0 3
  %1517 = vperm.xlu0 %1516, %v65
  %v1518 = vpop.permute.xlu0 %1517
  %1520 = vset.pattern.permute.xlu0 3
  %1521 = vperm.xlu0 %1520, %v66
  %v1522 = vpop.permute.xlu0 %1521
  %1524 = vset.pattern.permute.xlu0 3
  %1525 = vperm.xlu0 %1524, %v67
  %v1526 = vpop.permute.xlu0 %1525
  %1528 = vset.pattern.permute.xlu0 3
  %1529 = vperm.xlu0 %1528, %v68
  %v1530 = vpop.permute.xlu0 %1529
  %1532 = vset.pattern.permute.xlu0 3
  %1533 = vperm.xlu0 %1532, %v69
  %v1534 = vpop.permute.xlu0 %1533
  %1536 = vset.pattern.permute.xlu0 3
  %1537 = vperm.xlu0 %1536, %v70
  %v1538 = vpop.permute.xlu0 %1537
  %1540 = vset.pattern.permute.xlu0 3
  %1541 = vperm.xlu0 %1540, %v71
  %v1542 = vpop.permute.xlu0 %1541
  %1544 = vset.pattern.permute.xlu0 3
  %1545 = vperm.xlu0 %1544, %v72
  %v1546 = vpop.permute.xlu0 %1545
  %1548 = vset.pattern.permute.xlu0 3
  %1549 = vperm.xlu0 %1548, %v73
  %v1550 = vpop.permute.xlu0 %1549
  %1552 = vset.pattern.permute.xlu0 3
  %1553 = vperm.xlu0 %1552, %v74
  %v1554 = vpop.permute.xlu0 %1553
  %1556 = vset.pattern.permute.xlu0 3
  %1557 = vperm.xlu0 %1556, %v75
  %v1558 = vpop.permute.xlu0 %1557
  %1560 = vset.pattern.permute.xlu0 3
  %1561 = vperm.xlu0 %1560, %v76
  %v1562 = vpop.permute.xlu0 %1561
  %1564 = vset.pattern.permute.xlu0 3
  %1565 = vperm.xlu0 %1564, %v77
  %v1566 = vpop.permute.xlu0 %1565
  %1568 = vset.pattern.permute.xlu0 3
  %1569 = vperm.xlu0 %1568, %v78
  %v1570 = vpop.permute.xlu0 %1569
  %v1572 = vlaneseq
  %v1573 = vshrl.u32 %v1572, 7
  %v1574 = vsub.s32 3, %v1573
  %v1575 = vrot.slane %v80, %v1574
  %v1576 = vmul.f32 %v1318, %v1575
  %v1577 = vmul.f32 %v1322, %v1575
  %v1578 = vmul.f32 %v1326, %v1575
  %v1579 = vmul.f32 %v1330, %v1575
  %v1580 = vmul.f32 %v1334, %v1575
  %v1581 = vmul.f32 %v1338, %v1575
  %v1582 = vmul.f32 %v1342, %v1575
  %v1583 = vmul.f32 %v1346, %v1575
  %v1584 = vmul.f32 %v1350, %v1575
  %v1585 = vmul.f32 %v1354, %v1575
  %v1586 = vmul.f32 %v1358, %v1575
  %v1587 = vmul.f32 %v1362, %v1575
  %v1588 = vmul.f32 %v1366, %v1575
  %v1589 = vmul.f32 %v1370, %v1575
  %v1590 = vmul.f32 %v1374, %v1575
  %v1591 = vmul.f32 %v1378, %v1575
  %v1592 = vmul.f32 %v1382, %v1575
  %v1593 = vmul.f32 %v1386, %v1575
  %v1594 = vmul.f32 %v1390, %v1575
  %v1595 = vmul.f32 %v1394, %v1575
  %v1596 = vmul.f32 %v1398, %v1575
  %v1597 = vmul.f32 %v1402, %v1575
  %v1598 = vmul.f32 %v1406, %v1575
  %v1599 = vmul.f32 %v1410, %v1575
  %v1600 = vmul.f32 %v1414, %v1575
  %v1601 = vmul.f32 %v1418, %v1575
  %v1602 = vmul.f32 %v1422, %v1575
  %v1603 = vmul.f32 %v1426, %v1575
  %v1604 = vmul.f32 %v1430, %v1575
  %v1605 = vmul.f32 %v1434, %v1575
  %v1606 = vmul.f32 %v1438, %v1575
  %v1607 = vmul.f32 %v1442, %v1575
  %v1608 = vmul.f32 %v1446, %v1575
  %v1609 = vmul.f32 %v1450, %v1575
  %v1610 = vmul.f32 %v1454, %v1575
  %v1611 = vmul.f32 %v1458, %v1575
  %v1612 = vmul.f32 %v1462, %v1575
  %v1613 = vmul.f32 %v1466, %v1575
  %v1614 = vmul.f32 %v1470, %v1575
  %v1615 = vmul.f32 %v1474, %v1575
  %v1616 = vmul.f32 %v1478, %v1575
  %v1617 = vmul.f32 %v1482, %v1575
  %v1618 = vmul.f32 %v1486, %v1575
  %v1619 = vmul.f32 %v1490, %v1575
  %v1620 = vmul.f32 %v1494, %v1575
  %v1621 = vmul.f32 %v1498, %v1575
  %v1622 = vmul.f32 %v1502, %v1575
  %v1623 = vmul.f32 %v1506, %v1575
  %v1624 = vmul.f32 %v1510, %v1575
  %v1625 = vmul.f32 %v1514, %v1575
  %v1626 = vmul.f32 %v1518, %v1575
  %v1627 = vmul.f32 %v1522, %v1575
  %v1628 = vmul.f32 %v1526, %v1575
  %v1629 = vmul.f32 %v1530, %v1575
  %v1630 = vmul.f32 %v1534, %v1575
  %v1631 = vmul.f32 %v1538, %v1575
  %v1632 = vmul.f32 %v1542, %v1575
  %v1633 = vmul.f32 %v1546, %v1575
  %v1634 = vmul.f32 %v1550, %v1575
  %v1635 = vmul.f32 %v1554, %v1575
  %v1636 = vmul.f32 %v1558, %v1575
  %v1637 = vmul.f32 %v1562, %v1575
  %v1638 = vmul.f32 %v1566, %v1575
  %v1639 = vmul.f32 %v1570, %v1575
  %v1640 = vadd.f32 %v1252, %v1576
  %v1641 = vadd.f32 %v1253, %v1577
  %v1642 = vadd.f32 %v1254, %v1578
  %v1643 = vadd.f32 %v1255, %v1579
  %v1644 = vadd.f32 %v1256, %v1580
  %v1645 = vadd.f32 %v1257, %v1581
  %v1646 = vadd.f32 %v1258, %v1582
  %v1647 = vadd.f32 %v1259, %v1583
  %v1648 = vadd.f32 %v1260, %v1584
  %v1649 = vadd.f32 %v1261, %v1585
  %v1650 = vadd.f32 %v1262, %v1586
  %v1651 = vadd.f32 %v1263, %v1587
  %v1652 = vadd.f32 %v1264, %v1588
  %v1653 = vadd.f32 %v1265, %v1589
  %v1654 = vadd.f32 %v1266, %v1590
  %v1655 = vadd.f32 %v1267, %v1591
  %v1656 = vadd.f32 %v1268, %v1592
  %v1657 = vadd.f32 %v1269, %v1593
  %v1658 = vadd.f32 %v1270, %v1594
  %v1659 = vadd.f32 %v1271, %v1595
  %v1660 = vadd.f32 %v1272, %v1596
  %v1661 = vadd.f32 %v1273, %v1597
  %v1662 = vadd.f32 %v1274, %v1598
  %v1663 = vadd.f32 %v1275, %v1599
  %v1664 = vadd.f32 %v1276, %v1600
  %v1665 = vadd.f32 %v1277, %v1601
  %v1666 = vadd.f32 %v1278, %v1602
  %v1667 = vadd.f32 %v1279, %v1603
  %v1668 = vadd.f32 %v1280, %v1604
  %v1669 = vadd.f32 %v1281, %v1605
  %v1670 = vadd.f32 %v1282, %v1606
  %v1671 = vadd.f32 %v1283, %v1607
  %v1672 = vadd.f32 %v1284, %v1608
  %v1673 = vadd.f32 %v1285, %v1609
  %v1674 = vadd.f32 %v1286, %v1610
  %v1675 = vadd.f32 %v1287, %v1611
  %v1676 = vadd.f32 %v1288, %v1612
  %v1677 = vadd.f32 %v1289, %v1613
  %v1678 = vadd.f32 %v1290, %v1614
  %v1679 = vadd.f32 %v1291, %v1615
  %v1680 = vadd.f32 %v1292, %v1616
  %v1681 = vadd.f32 %v1293, %v1617
  %v1682 = vadd.f32 %v1294, %v1618
  %v1683 = vadd.f32 %v1295, %v1619
  %v1684 = vadd.f32 %v1296, %v1620
  %v1685 = vadd.f32 %v1297, %v1621
  %v1686 = vadd.f32 %v1298, %v1622
  %v1687 = vadd.f32 %v1299, %v1623
  %v1688 = vadd.f32 %v1300, %v1624
  %v1689 = vadd.f32 %v1301, %v1625
  %v1690 = vadd.f32 %v1302, %v1626
  %v1691 = vadd.f32 %v1303, %v1627
  %v1692 = vadd.f32 %v1304, %v1628
  %v1693 = vadd.f32 %v1305, %v1629
  %v1694 = vadd.f32 %v1306, %v1630
  %v1695 = vadd.f32 %v1307, %v1631
  %v1696 = vadd.f32 %v1308, %v1632
  %v1697 = vadd.f32 %v1309, %v1633
  %v1698 = vadd.f32 %v1310, %v1634
  %v1699 = vadd.f32 %v1311, %v1635
  %v1700 = vadd.f32 %v1312, %v1636
  %v1701 = vadd.f32 %v1313, %v1637
  %v1702 = vadd.f32 %v1314, %v1638
  %v1703 = vadd.f32 %v1315, %v1639
  %vm1704 = vcmp.ge.f32.partialorder %v1640, 0.0
  %vm1705 = vcmp.ge.f32.partialorder %v1641, 0.0
  %vm1706 = vcmp.ge.f32.partialorder %v1642, 0.0
  %vm1707 = vcmp.ge.f32.partialorder %v1643, 0.0
  %vm1708 = vcmp.ge.f32.partialorder %v1644, 0.0
  %vm1709 = vcmp.ge.f32.partialorder %v1645, 0.0
  %vm1710 = vcmp.ge.f32.partialorder %v1646, 0.0
  %vm1711 = vcmp.ge.f32.partialorder %v1647, 0.0
  %vm1712 = vcmp.ge.f32.partialorder %v1648, 0.0
  %vm1713 = vcmp.ge.f32.partialorder %v1649, 0.0
  %vm1714 = vcmp.ge.f32.partialorder %v1650, 0.0
  %vm1715 = vcmp.ge.f32.partialorder %v1651, 0.0
  %vm1716 = vcmp.ge.f32.partialorder %v1652, 0.0
  %vm1717 = vcmp.ge.f32.partialorder %v1653, 0.0
  %vm1718 = vcmp.ge.f32.partialorder %v1654, 0.0
  %vm1719 = vcmp.ge.f32.partialorder %v1655, 0.0
  %vm1720 = vcmp.ge.f32.partialorder %v1656, 0.0
  %vm1721 = vcmp.ge.f32.partialorder %v1657, 0.0
  %vm1722 = vcmp.ge.f32.partialorder %v1658, 0.0
  %vm1723 = vcmp.ge.f32.partialorder %v1659, 0.0
  %vm1724 = vcmp.ge.f32.partialorder %v1660, 0.0
  %vm1725 = vcmp.ge.f32.partialorder %v1661, 0.0
  %vm1726 = vcmp.ge.f32.partialorder %v1662, 0.0
  %vm1727 = vcmp.ge.f32.partialorder %v1663, 0.0
  %vm1728 = vcmp.ge.f32.partialorder %v1664, 0.0
  %vm1729 = vcmp.ge.f32.partialorder %v1665, 0.0
  %vm1730 = vcmp.ge.f32.partialorder %v1666, 0.0
  %vm1731 = vcmp.ge.f32.partialorder %v1667, 0.0
  %vm1732 = vcmp.ge.f32.partialorder %v1668, 0.0
  %vm1733 = vcmp.ge.f32.partialorder %v1669, 0.0
  %vm1734 = vcmp.ge.f32.partialorder %v1670, 0.0
  %vm1735 = vcmp.ge.f32.partialorder %v1671, 0.0
  %vm1736 = vcmp.ge.f32.partialorder %v1672, 0.0
  %vm1737 = vcmp.ge.f32.partialorder %v1673, 0.0
  %vm1738 = vcmp.ge.f32.partialorder %v1674, 0.0
  %vm1739 = vcmp.ge.f32.partialorder %v1675, 0.0
  %vm1740 = vcmp.ge.f32.partialorder %v1676, 0.0
  %vm1741 = vcmp.ge.f32.partialorder %v1677, 0.0
  %vm1742 = vcmp.ge.f32.partialorder %v1678, 0.0
  %vm1743 = vcmp.ge.f32.partialorder %v1679, 0.0
  %vm1744 = vcmp.ge.f32.partialorder %v1680, 0.0
  %vm1745 = vcmp.ge.f32.partialorder %v1681, 0.0
  %vm1746 = vcmp.ge.f32.partialorder %v1682, 0.0
  %vm1747 = vcmp.ge.f32.partialorder %v1683, 0.0
  %vm1748 = vcmp.ge.f32.partialorder %v1684, 0.0
  %vm1749 = vcmp.ge.f32.partialorder %v1685, 0.0
  %vm1750 = vcmp.ge.f32.partialorder %v1686, 0.0
  %vm1751 = vcmp.ge.f32.partialorder %v1687, 0.0
  %vm1752 = vcmp.ge.f32.partialorder %v1688, 0.0
  %vm1753 = vcmp.ge.f32.partialorder %v1689, 0.0
  %vm1754 = vcmp.ge.f32.partialorder %v1690, 0.0
  %vm1755 = vcmp.ge.f32.partialorder %v1691, 0.0
  %vm1756 = vcmp.ge.f32.partialorder %v1692, 0.0
  %vm1757 = vcmp.ge.f32.partialorder %v1693, 0.0
  %vm1758 = vcmp.ge.f32.partialorder %v1694, 0.0
  %vm1759 = vcmp.ge.f32.partialorder %v1695, 0.0
  %vm1760 = vcmp.ge.f32.partialorder %v1696, 0.0
  %vm1761 = vcmp.ge.f32.partialorder %v1697, 0.0
  %vm1762 = vcmp.ge.f32.partialorder %v1698, 0.0
  %vm1763 = vcmp.ge.f32.partialorder %v1699, 0.0
  %vm1764 = vcmp.ge.f32.partialorder %v1700, 0.0
  %vm1765 = vcmp.ge.f32.partialorder %v1701, 0.0
  %vm1766 = vcmp.ge.f32.partialorder %v1702, 0.0
  %vm1767 = vcmp.ge.f32.partialorder %v1703, 0.0
  %v1768 = vmul.f32 %v1640, 0.1
  %v1769 = vmul.f32 %v1641, 0.1
  %v1770 = vmul.f32 %v1642, 0.1
  %v1771 = vmul.f32 %v1643, 0.1
  %v1772 = vmul.f32 %v1644, 0.1
  %v1773 = vmul.f32 %v1645, 0.1
  %v1774 = vmul.f32 %v1646, 0.1
  %v1775 = vmul.f32 %v1647, 0.1
  %v1776 = vmul.f32 %v1648, 0.1
  %v1777 = vmul.f32 %v1649, 0.1
  %v1778 = vmul.f32 %v1650, 0.1
  %v1779 = vmul.f32 %v1651, 0.1
  %v1780 = vmul.f32 %v1652, 0.1
  %v1781 = vmul.f32 %v1653, 0.1
  %v1782 = vmul.f32 %v1654, 0.1
  %v1783 = vmul.f32 %v1655, 0.1
  %v1784 = vmul.f32 %v1656, 0.1
  %v1785 = vmul.f32 %v1657, 0.1
  %v1786 = vmul.f32 %v1658, 0.1
  %v1787 = vmul.f32 %v1659, 0.1
  %v1788 = vmul.f32 %v1660, 0.1
  %v1789 = vmul.f32 %v1661, 0.1
  %v1790 = vmul.f32 %v1662, 0.1
  %v1791 = vmul.f32 %v1663, 0.1
  %v1792 = vmul.f32 %v1664, 0.1
  %v1793 = vmul.f32 %v1665, 0.1
  %v1794 = vmul.f32 %v1666, 0.1
  %v1795 = vmul.f32 %v1667, 0.1
  %v1796 = vmul.f32 %v1668, 0.1
  %v1797 = vmul.f32 %v1669, 0.1
  %v1798 = vmul.f32 %v1670, 0.1
  %v1799 = vmul.f32 %v1671, 0.1
  %v1800 = vmul.f32 %v1672, 0.1
  %v1801 = vmul.f32 %v1673, 0.1
  %v1802 = vmul.f32 %v1674, 0.1
  %v1803 = vmul.f32 %v1675, 0.1
  %v1804 = vmul.f32 %v1676, 0.1
  %v1805 = vmul.f32 %v1677, 0.1
  %v1806 = vmul.f32 %v1678, 0.1
  %v1807 = vmul.f32 %v1679, 0.1
  %v1808 = vmul.f32 %v1680, 0.1
  %v1809 = vmul.f32 %v1681, 0.1
  %v1810 = vmul.f32 %v1682, 0.1
  %v1811 = vmul.f32 %v1683, 0.1
  %v1812 = vmul.f32 %v1684, 0.1
  %v1813 = vmul.f32 %v1685, 0.1
  %v1814 = vmul.f32 %v1686, 0.1
  %v1815 = vmul.f32 %v1687, 0.1
  %v1816 = vmul.f32 %v1688, 0.1
  %v1817 = vmul.f32 %v1689, 0.1
  %v1818 = vmul.f32 %v1690, 0.1
  %v1819 = vmul.f32 %v1691, 0.1
  %v1820 = vmul.f32 %v1692, 0.1
  %v1821 = vmul.f32 %v1693, 0.1
  %v1822 = vmul.f32 %v1694, 0.1
  %v1823 = vmul.f32 %v1695, 0.1
  %v1824 = vmul.f32 %v1696, 0.1
  %v1825 = vmul.f32 %v1697, 0.1
  %v1826 = vmul.f32 %v1698, 0.1
  %v1827 = vmul.f32 %v1699, 0.1
  %v1828 = vmul.f32 %v1700, 0.1
  %v1829 = vmul.f32 %v1701, 0.1
  %v1830 = vmul.f32 %v1702, 0.1
  %v1831 = vmul.f32 %v1703, 0.1
  %v1832 = vsel %vm1704, %v1640, %v1768
  %v1833 = vsel %vm1705, %v1641, %v1769
  %v1834 = vsel %vm1706, %v1642, %v1770
  %v1835 = vsel %vm1707, %v1643, %v1771
  %v1836 = vsel %vm1708, %v1644, %v1772
  %v1837 = vsel %vm1709, %v1645, %v1773
  %v1838 = vsel %vm1710, %v1646, %v1774
  %v1839 = vsel %vm1711, %v1647, %v1775
  %v1840 = vsel %vm1712, %v1648, %v1776
  %v1841 = vsel %vm1713, %v1649, %v1777
  %v1842 = vsel %vm1714, %v1650, %v1778
  %v1843 = vsel %vm1715, %v1651, %v1779
  %v1844 = vsel %vm1716, %v1652, %v1780
  %v1845 = vsel %vm1717, %v1653, %v1781
  %v1846 = vsel %vm1718, %v1654, %v1782
  %v1847 = vsel %vm1719, %v1655, %v1783
  %v1848 = vsel %vm1720, %v1656, %v1784
  %v1849 = vsel %vm1721, %v1657, %v1785
  %v1850 = vsel %vm1722, %v1658, %v1786
  %v1851 = vsel %vm1723, %v1659, %v1787
  %v1852 = vsel %vm1724, %v1660, %v1788
  %v1853 = vsel %vm1725, %v1661, %v1789
  %v1854 = vsel %vm1726, %v1662, %v1790
  %v1855 = vsel %vm1727, %v1663, %v1791
  %v1856 = vsel %vm1728, %v1664, %v1792
  %v1857 = vsel %vm1729, %v1665, %v1793
  %v1858 = vsel %vm1730, %v1666, %v1794
  %v1859 = vsel %vm1731, %v1667, %v1795
  %v1860 = vsel %vm1732, %v1668, %v1796
  %v1861 = vsel %vm1733, %v1669, %v1797
  %v1862 = vsel %vm1734, %v1670, %v1798
  %v1863 = vsel %vm1735, %v1671, %v1799
  %v1864 = vsel %vm1736, %v1672, %v1800
  %v1865 = vsel %vm1737, %v1673, %v1801
  %v1866 = vsel %vm1738, %v1674, %v1802
  %v1867 = vsel %vm1739, %v1675, %v1803
  %v1868 = vsel %vm1740, %v1676, %v1804
  %v1869 = vsel %vm1741, %v1677, %v1805
  %v1870 = vsel %vm1742, %v1678, %v1806
  %v1871 = vsel %vm1743, %v1679, %v1807
  %v1872 = vsel %vm1744, %v1680, %v1808
  %v1873 = vsel %vm1745, %v1681, %v1809
  %v1874 = vsel %vm1746, %v1682, %v1810
  %v1875 = vsel %vm1747, %v1683, %v1811
  %v1876 = vsel %vm1748, %v1684, %v1812
  %v1877 = vsel %vm1749, %v1685, %v1813
  %v1878 = vsel %vm1750, %v1686, %v1814
  %v1879 = vsel %vm1751, %v1687, %v1815
  %v1880 = vsel %vm1752, %v1688, %v1816
  %v1881 = vsel %vm1753, %v1689, %v1817
  %v1882 = vsel %vm1754, %v1690, %v1818
  %v1883 = vsel %vm1755, %v1691, %v1819
  %v1884 = vsel %vm1756, %v1692, %v1820
  %v1885 = vsel %vm1757, %v1693, %v1821
  %v1886 = vsel %vm1758, %v1694, %v1822
  %v1887 = vsel %vm1759, %v1695, %v1823
  %v1888 = vsel %vm1760, %v1696, %v1824
  %v1889 = vsel %vm1761, %v1697, %v1825
  %v1890 = vsel %vm1762, %v1698, %v1826
  %v1891 = vsel %vm1763, %v1699, %v1827
  %v1892 = vsel %vm1764, %v1700, %v1828
  %v1893 = vsel %vm1765, %v1701, %v1829
  %v1894 = vsel %vm1766, %v1702, %v1830
  %v1895 = vsel %vm1767, %v1703, %v1831
  %vm1896 = vcmask 130048
  %1897 = vst.msk [vmem:[%s3] sm:$0xff] %vm1896, %v1832
  %1898 = vst.msk [vmem:[%s3 + $0x8] sm:$0xff] %vm1896, %v1833
  %1899 = vst.msk [vmem:[%s3 + $0x10] sm:$0xff] %vm1896, %v1834
  %1900 = vst.msk [vmem:[%s3 + $0x18] sm:$0xff] %vm1896, %v1835
  %1901 = vst.msk [vmem:[%s3 + $0x20] sm:$0xff] %vm1896, %v1836
  %1902 = vst.msk [vmem:[%s3 + $0x28] sm:$0xff] %vm1896, %v1837
  %1903 = vst.msk [vmem:[%s3 + $0x30] sm:$0xff] %vm1896, %v1838
  %1904 = vst.msk [vmem:[%s3 + $0x38] sm:$0xff] %vm1896, %v1839
  %1905 = vst.msk [vmem:[%s3 + $0x40] sm:$0xff] %vm1896, %v1840
  %1906 = vst.msk [vmem:[%s3 + $0x48] sm:$0xff] %vm1896, %v1841
  %1907 = vst.msk [vmem:[%s3 + $0x50] sm:$0xff] %vm1896, %v1842
  %1908 = vst.msk [vmem:[%s3 + $0x58] sm:$0xff] %vm1896, %v1843
  %1909 = vst.msk [vmem:[%s3 + $0x60] sm:$0xff] %vm1896, %v1844
  %1910 = vst.msk [vmem:[%s3 + $0x68] sm:$0xff] %vm1896, %v1845
  %1911 = vst.msk [vmem:[%s3 + $0x70] sm:$0xff] %vm1896, %v1846
  %1912 = vst.msk [vmem:[%s3 + $0x78] sm:$0xff] %vm1896, %v1847
  %1913 = vst.msk [vmem:[%s3 + $0x80] sm:$0xff] %vm1896, %v1848
  %1914 = vst.msk [vmem:[%s3 + $0x88] sm:$0xff] %vm1896, %v1849
  %1915 = vst.msk [vmem:[%s3 + $0x90] sm:$0xff] %vm1896, %v1850
  %1916 = vst.msk [vmem:[%s3 + $0x98] sm:$0xff] %vm1896, %v1851
  %1917 = vst.msk [vmem:[%s3 + $0xa0] sm:$0xff] %vm1896, %v1852
  %1918 = vst.msk [vmem:[%s3 + $0xa8] sm:$0xff] %vm1896, %v1853
  %1919 = vst.msk [vmem:[%s3 + $0xb0] sm:$0xff] %vm1896, %v1854
  %1920 = vst.msk [vmem:[%s3 + $0xb8] sm:$0xff] %vm1896, %v1855
  %1921 = vst.msk [vmem:[%s3 + $0xc0] sm:$0xff] %vm1896, %v1856
  %1922 = vst.msk [vmem:[%s3 + $0xc8] sm:$0xff] %vm1896, %v1857
  %1923 = vst.msk [vmem:[%s3 + $0xd0] sm:$0xff] %vm1896, %v1858
  %1924 = vst.msk [vmem:[%s3 + $0xd8] sm:$0xff] %vm1896, %v1859
  %1925 = vst.msk [vmem:[%s3 + $0xe0] sm:$0xff] %vm1896, %v1860
  %1926 = vst.msk [vmem:[%s3 + $0xe8] sm:$0xff] %vm1896, %v1861
  %1927 = vst.msk [vmem:[%s3 + $0xf0] sm:$0xff] %vm1896, %v1862
  %1928 = vst.msk [vmem:[%s3 + $0xf8] sm:$0xff] %vm1896, %v1863
  %1929 = vst.msk [vmem:[%s3 + $0x100] sm:$0xff] %vm1896, %v1864
  %1930 = vst.msk [vmem:[%s3 + $0x108] sm:$0xff] %vm1896, %v1865
  %1931 = vst.msk [vmem:[%s3 + $0x110] sm:$0xff] %vm1896, %v1866
  %1932 = vst.msk [vmem:[%s3 + $0x118] sm:$0xff] %vm1896, %v1867
  %1933 = vst.msk [vmem:[%s3 + $0x120] sm:$0xff] %vm1896, %v1868
  %1934 = vst.msk [vmem:[%s3 + $0x128] sm:$0xff] %vm1896, %v1869
  %1935 = vst.msk [vmem:[%s3 + $0x130] sm:$0xff] %vm1896, %v1870
  %1936 = vst.msk [vmem:[%s3 + $0x138] sm:$0xff] %vm1896, %v1871
  %1937 = vst.msk [vmem:[%s3 + $0x140] sm:$0xff] %vm1896, %v1872
  %1938 = vst.msk [vmem:[%s3 + $0x148] sm:$0xff] %vm1896, %v1873
  %1939 = vst.msk [vmem:[%s3 + $0x150] sm:$0xff] %vm1896, %v1874
  %1940 = vst.msk [vmem:[%s3 + $0x158] sm:$0xff] %vm1896, %v1875
  %1941 = vst.msk [vmem:[%s3 + $0x160] sm:$0xff] %vm1896, %v1876
  %1942 = vst.msk [vmem:[%s3 + $0x168] sm:$0xff] %vm1896, %v1877
  %1943 = vst.msk [vmem:[%s3 + $0x170] sm:$0xff] %vm1896, %v1878
  %1944 = vst.msk [vmem:[%s3 + $0x178] sm:$0xff] %vm1896, %v1879
  %1945 = vst.msk [vmem:[%s3 + $0x180] sm:$0xff] %vm1896, %v1880
  %1946 = vst.msk [vmem:[%s3 + $0x188] sm:$0xff] %vm1896, %v1881
  %1947 = vst.msk [vmem:[%s3 + $0x190] sm:$0xff] %vm1896, %v1882
  %1948 = vst.msk [vmem:[%s3 + $0x198] sm:$0xff] %vm1896, %v1883
  %1949 = vst.msk [vmem:[%s3 + $0x1a0] sm:$0xff] %vm1896, %v1884
  %1950 = vst.msk [vmem:[%s3 + $0x1a8] sm:$0xff] %vm1896, %v1885
  %1951 = vst.msk [vmem:[%s3 + $0x1b0] sm:$0xff] %vm1896, %v1886
  %1952 = vst.msk [vmem:[%s3 + $0x1b8] sm:$0xff] %vm1896, %v1887
  %1953 = vst.msk [vmem:[%s3 + $0x1c0] sm:$0xff] %vm1896, %v1888
  %1954 = vst.msk [vmem:[%s3 + $0x1c8] sm:$0xff] %vm1896, %v1889
  %1955 = vst.msk [vmem:[%s3 + $0x1d0] sm:$0xff] %vm1896, %v1890
  %1956 = vst.msk [vmem:[%s3 + $0x1d8] sm:$0xff] %vm1896, %v1891
  %1957 = vst.msk [vmem:[%s3 + $0x1e0] sm:$0xff] %vm1896, %v1892
  %1958 = vst.msk [vmem:[%s3 + $0x1e8] sm:$0xff] %vm1896, %v1893
  %1959 = vst.msk [vmem:[%s3 + $0x1f0] sm:$0xff] %vm1896, %v1894
  %1960 = vst.msk [vmem:[%s3 + $0x1f8] sm:$0xff] %vm1896, %v1895
  // Predicated region
  $region14: #{_hint_layer_apply.1} parent=0 // pred_check
    _
  $region15: #{_hint_layer_apply.1} parent=0 // pred_check_branch
    %1962 = sbr.rel (0) target = $region17
  $region16: #{_hint_layer_apply.1} parent=0 // pred_region
    _
  $region17: #{_hint_layer_apply.1} parent=0 // pred_fallthru
    _
  // Predicated region
  $region18: #{_hint_layer_apply.1} parent=0 // pred_check
    _
  $region19: #{_hint_layer_apply.1} parent=0 // pred_check_branch
    %1964 = sbr.rel (0) target = $region21
  $region20: #{_hint_layer_apply.1} parent=0 // pred_region
    _
  $region21: #{_hint_layer_apply.1} parent=0 // pred_fallthru
    _

</llo_original>
